<compile_context>
chip_gen: v7x
topology: tpu7x:2x2x1
jax: 0.10.0
libtpu: 0.0.40
codegen_flags: <defaults>
</compile_context>

<pallas_src>
import math

import jax
import jax.numpy as jnp
from jax.experimental import pallas as pl
from jax.experimental.pallas import tpu as pltpu

BN_EPS = 1e-5                       # PyTorch BatchNorm2d default eps


def _hw_config():
    """Generation-aware spatial-tile target and scoped-VMEM limit."""
    vmem = 64 * 1024 * 1024
    try:
        vmem = int(getattr(pltpu.get_tpu_info(), "vmem_capacity_bytes", vmem))
    except Exception:
        pass
    if vmem >= 100 * 1024 * 1024:          # v5e / v6e: 128 MiB VMEM -> bigger tiles, higher cap
        return {"ts_target": 2048, "vmem_limit": 100 * 1024 * 1024}
    # v7x: 64 MiB VMEM per TC -> hard budget, never full-extent fallback
    return {"ts_target": 1024, "vmem_limit": 44 * 1024 * 1024}


_CFG = _hw_config()


def _round_up(x, m):
    return ((x + m - 1) // m) * m


def _pick_spatial_tile(sp, bytes_per_lane):
    """Largest multiple-of-128 divisor of sp that is <= ts_target and whose double-buffered
    blocks fit the per-step VMEM budget.  sp must already be a multiple of 128."""
    budget = _CFG["vmem_limit"] // 2           # headroom for weights / compiler scratch
    target = min(_CFG["ts_target"], sp)
    best = 128
    t = 128
    while t <= target:
        if sp % t == 0 and t * bytes_per_lane <= budget:
            best = t
        t += 128
    return best


def _pad_lanes(x, sp):
    """Zero-pad the last (lane) dim of x up to sp."""
    s = x.shape[-1]
    if s == sp:
        return x
    return jnp.pad(x, [(0, 0)] * (x.ndim - 1) + [(0, sp - s)])


def _compiler_params(semantics):
    return pltpu.CompilerParams(dimension_semantics=semantics,
                                vmem_limit_bytes=_CFG["vmem_limit"])


# ---------------------------------------------------------------------------
# Pallas kernels
# ---------------------------------------------------------------------------
def _conv_stats_kernel(x_ref, w_ref, z_ref, st_ref):
    """z = w @ x (bf16 MXU, f32 acc) + per-channel (sum, sumsq) accumulated in the
    resident stats block (its BlockSpec is constant over the spatial grid axis, so it
    lives in VMEM across j and is written back to HBM once per batch element).

    x: (Cin, TS) f32, w: (Cout, Cin) bf16, z: (Cout, TS) bf16, st: (Cout, 2) f32.
    """
    j = pl.program_id(1)
    x = x_ref[...].astype(jnp.bfloat16)
    z = jnp.dot(w_ref[...], x, preferred_element_type=jnp.float32)
    z_ref[...] = z.astype(z_ref.dtype)                      # bf16 writeback (half the bytes)

    s = jnp.sum(z, axis=1, keepdims=True)                   # (Cout, 1)
    sq = jnp.sum(z * z, axis=1, keepdims=True)
    col = jax.lax.broadcasted_iota(jnp.int32, st_ref.shape, 1)
    upd = jnp.where(col == 0, s, sq)

    @pl.when(j == 0)
    def _():
        st_ref[...] = jnp.zeros_like(st_ref)

    st_ref[...] += upd


def _fu_stats_kernel(xr_ref, xi_ref, wr_ref, wi_ref, st_ref):
    """FourierUnit conv, pass 1 (stats only — no z writeback).
    Stacked matmuls: z = W[:, :c] @ xr + W[:, c:] @ xi  -> (2c, TS)."""
    j = pl.program_id(1)
    z = (jnp.dot(wr_ref[...], xr_ref[...], preferred_element_type=jnp.float32)
         + jnp.dot(wi_ref[...], xi_ref[...], preferred_element_type=jnp.float32))
    s = jnp.sum(z, axis=1, keepdims=True)                   # (2c, 1)
    sq = jnp.sum(z * z, axis=1, keepdims=True)
    col = jax.lax.broadcasted_iota(jnp.int32, st_ref.shape, 1)
    upd = jnp.where(col == 0, s, sq)

    @pl.when(j == 0)
    def _():
        st_ref[...] = jnp.zeros_like(st_ref)

    st_ref[...] += upd


def _fu_conv_bn_relu_kernel(xr_ref, xi_ref, wr_ref, wi_ref, sc_ref, sh_ref, yr_ref, yi_ref):
    """FourierUnit conv, pass 2: recompute the stacked matmul fused with BN+ReLU and emit
    bf16 real/imag halves (only consumed by complex/irfft2)."""
    z = (jnp.dot(wr_ref[...], xr_ref[...], preferred_element_type=jnp.float32)
         + jnp.dot(wi_ref[...], xi_ref[...], preferred_element_type=jnp.float32))
    y = jnp.maximum(z * sc_ref[...] + sh_ref[...], 0.0)     # (2c, TS)
    c = yr_ref.shape[0]
    yr_ref[...] = y[:c].astype(yr_ref.dtype)
    yi_ref[...] = y[c:].astype(yi_ref.dtype)


def _bn_relu_kernel(z_ref, scale_ref, shift_ref, o_ref):
    """y = relu(z * scale + shift) — BN folded into one per-channel FMA-shaped op."""
    z = z_ref[...].astype(jnp.float32)                      # (C, TS)
    o_ref[...] = jnp.maximum(z * scale_ref[...] + shift_ref[...], 0.0).astype(o_ref.dtype)


def _bn_add_conv_kernel(z_ref, fu_ref, sc_ref, sh_ref, w_ref, o_ref):
    """o = w2 @ (relu(z*scale+shift) + fu): conv1's BN+ReLU re-derived from bf16 z
    (half the activation-read bytes) fused with the residual add + final 1x1 conv."""
    y = jnp.maximum(z_ref[...].astype(jnp.float32) * sc_ref[...] + sh_ref[...], 0.0)
    s = (y + fu_ref[...]).astype(jnp.bfloat16)
    o_ref[...] = jnp.dot(w_ref[...], s,
                         preferred_element_type=jnp.float32).astype(o_ref.dtype)


# ---------------------------------------------------------------------------
# pallas_call wrappers (grid: batch x spatial tiles)
# ---------------------------------------------------------------------------
def conv1x1_stats(x, w):
    """x: (N, Cin, Sp) f32 (lane-padded), w: (Cout, Cin) f32
       -> z bf16 (N, Cout, Sp), stats f32 (N, Cout, 2)."""
    n, cin, sp = x.shape
    cout = w.shape[0]
    ts = _pick_spatial_tile(sp, 2 * (cin * 4 + cout * 2))
    wb = w.astype(jnp.bfloat16)
    cost = pl.CostEstimate(
        flops=2 * n * sp * cin * cout, transcendentals=0,
        bytes_accessed=n * sp * (cin * 4 + cout * 2) + cin * cout * 2 + n * cout * 8)
    return pl.pallas_call(
        _conv_stats_kernel,
        out_shape=(jax.ShapeDtypeStruct((n, cout, sp), jnp.bfloat16),
                   jax.ShapeDtypeStruct((n, cout, 2), jnp.float32)),
        grid=(n, sp // ts),
        in_specs=[
            pl.BlockSpec((None, cin, ts), lambda i, j: (i, 0, j)),
            pl.BlockSpec((cout, cin), lambda i, j: (0, 0)),
        ],
        out_specs=(
            pl.BlockSpec((None, cout, ts), lambda i, j: (i, 0, j)),
            pl.BlockSpec((None, cout, 2), lambda i, j: (i, 0, 0)),   # resident accumulator
        ),
        compiler_params=_compiler_params(("parallel", "arbitrary")),
        cost_estimate=cost,
    )(x, wb)


def fu_conv_stats(xr, xi, w_r, w_i):
    """xr/xi: (N, c, Sfp) bf16; w_r/w_i: (2c, c) bf16 -> stats f32 (N, 2c, 2)."""
    n, c, sp = xr.shape
    c2 = w_r.shape[0]
    ts = _pick_spatial_tile(sp, 2 * 4 * c)
    xspec = pl.BlockSpec((None, c, ts), lambda i, j: (i, 0, j))
    wspec = pl.BlockSpec((c2, c), lambda i, j: (0, 0))
    cost = pl.CostEstimate(
        flops=4 * n * sp * c * c2, transcendentals=0,
        bytes_accessed=2 * n * sp * c * 2 + 2 * c2 * c * 2 + n * c2 * 8)
    return pl.pallas_call(
        _fu_stats_kernel,
        out_shape=jax.ShapeDtypeStruct((n, c2, 2), jnp.float32),
        grid=(n, sp // ts),
        in_specs=[xspec, xspec, wspec, wspec],
        out_specs=pl.BlockSpec((None, c2, 2), lambda i, j: (i, 0, 0)),   # resident accumulator
        compiler_params=_compiler_params(("parallel", "arbitrary")),
        cost_estimate=cost,
    )(xr, xi, w_r, w_i)


def fu_conv_bn_relu(xr, xi, w_r, w_i, scale, shift):
    """Pass 2 of the FourierUnit conv: conv + BN + ReLU -> bf16 real/imag (N, c, Sfp)."""
    n, c, sp = xr.shape
    c2 = w_r.shape[0]
    ts = _pick_spatial_tile(sp, 16 * c)
    xspec = pl.BlockSpec((None, c, ts), lambda i, j: (i, 0, j))
    wspec = pl.BlockSpec((c2, c), lambda i, j: (0, 0))
    vspec = pl.BlockSpec((c2, 1), lambda i, j: (0, 0))
    yspec = pl.BlockSpec((None, c, ts), lambda i, j: (i, 0, j))
    cost = pl.CostEstimate(
        flops=4 * n * sp * c * c2 + 4 * n * sp * c2, transcendentals=0,
        bytes_accessed=4 * n * sp * c * 2 + 2 * c2 * c * 2 + 2 * c2 * 4)
    return pl.pallas_call(
        _fu_conv_bn_relu_kernel,
        out_shape=(jax.ShapeDtypeStruct((n, c, sp), jnp.bfloat16),
                   jax.ShapeDtypeStruct((n, c, sp), jnp.bfloat16)),
        grid=(n, sp // ts),
        in_specs=[xspec, xspec, wspec, wspec, vspec, vspec],
        out_specs=(yspec, yspec),
        compiler_params=_compiler_params(("parallel", "parallel")),
        cost_estimate=cost,
    )(xr, xi, w_r, w_i, scale, shift)


def bn_relu(z, scale, shift):
    """z: (N, C, Sp) bf16; scale/shift: (C, 1) f32 -> f32 (N, C, Sp)."""
    n, c, sp = z.shape
    ts = _pick_spatial_tile(sp, 12 * c)
    cost = pl.CostEstimate(
        flops=3 * n * c * sp, transcendentals=0,
        bytes_accessed=n * c * sp * 6 + 2 * c * 4)
    return pl.pallas_call(
        _bn_relu_kernel,
        out_shape=jax.ShapeDtypeStruct((n, c, sp), jnp.float32),
        grid=(n, sp // ts),
        in_specs=[
            pl.BlockSpec((None, c, ts), lambda i, j: (i, 0, j)),
            pl.BlockSpec((c, 1), lambda i, j: (0, 0)),
            pl.BlockSpec((c, 1), lambda i, j: (0, 0)),
        ],
        out_specs=pl.BlockSpec((None, c, ts), lambda i, j: (i, 0, j)),
        compiler_params=_compiler_params(("parallel", "parallel")),
        cost_estimate=cost,
    )(z, scale, shift)


def bn_add_conv1x1(z1, fu, scale, shift, w):
    """z1 bf16 (N, Cin, Sp), fu f32 (N, Cin, Sp), w (Cout, Cin) -> f32 (N, Cout, Sp)."""
    n, cin, sp = z1.shape
    cout = w.shape[0]
    ts = _pick_spatial_tile(sp, 12 * cin + 8 * cout)
    wb = w.astype(jnp.bfloat16)
    cost = pl.CostEstimate(
        flops=2 * n * sp * cin * cout + 4 * n * sp * cin, transcendentals=0,
        bytes_accessed=n * sp * (cin * 2 + cin * 4 + cout * 4) + cout * cin * 2)
    return pl.pallas_call(
        _bn_add_conv_kernel,
        out_shape=jax.ShapeDtypeStruct((n, cout, sp), jnp.float32),
        grid=(n, sp // ts),
        in_specs=[
            pl.BlockSpec((None, cin, ts), lambda i, j: (i, 0, j)),
            pl.BlockSpec((None, cin, ts), lambda i, j: (i, 0, j)),
            pl.BlockSpec((cin, 1), lambda i, j: (0, 0)),
            pl.BlockSpec((cin, 1), lambda i, j: (0, 0)),
            pl.BlockSpec((cout, cin), lambda i, j: (0, 0)),
        ],
        out_specs=pl.BlockSpec((None, cout, ts), lambda i, j: (i, 0, j)),
        compiler_params=_compiler_params(("parallel", "parallel")),
        cost_estimate=cost,
    )(z1, fu, scale, shift, wb)


# ---------------------------------------------------------------------------
# BN fold (tiny O(N*C) glue: per-batch partial stats -> per-channel scale/shift)
# ---------------------------------------------------------------------------
def _bn_fold(stats, gamma, beta, count):
    """stats: (N, C, 2) of (sum, sumsq).  count = UNPADDED element count (padded lanes
    contribute exact zeros through the matmuls, so the sums stay exact)."""
    tot = jnp.sum(stats, axis=0)                            # (C, 2)
    mean = tot[:, 0:1] / count
    # TODO(synk): E[z^2]-E[z]^2 can cancel when |mean| >> std; a shifted-sum/Welford fold
    # would be more robust.  Clamp keeps the variance non-negative.
    var = jnp.maximum(tot[:, 1:2] / count - mean * mean, 0.0)   # biased var (training BN)
    scale = gamma * jax.lax.rsqrt(var + BN_EPS)
    shift = beta - mean * scale
    return scale, shift


# ---------------------------------------------------------------------------
# Model pieces
# ---------------------------------------------------------------------------
def fourier_unit(x_nchw, w_fu, gamma_fu, beta_fu):
    """FourierUnit.forward: rfft2 -> 1x1 conv on cat([real, imag], dim=1) -> BN -> ReLU
    -> complex -> irfft2.  This spec uses torch.cat (block [all real | all imag] channel
    layout), which matches the row/column split of w_fu below."""
    n, c, h, w = x_nchw.shape
    # TODO(synk): rfft2 / irfft2 have no Pallas primitive; they stay in XLA glue.
    ffted = jnp.fft.rfft2(x_nchw, axes=(2, 3), norm='ortho')       # (n, c, h, wf) complex64
    wf = ffted.shape[-1]
    sf = h * wf
    sfp = _round_up(sf, 128)                                       # lane-dense zero pad
    xr = _pad_lanes(ffted.real.astype(jnp.bfloat16).reshape(n, c, sf), sfp)
    xi = _pad_lanes(ffted.imag.astype(jnp.bfloat16).reshape(n, c, sf), sfp)
    wb = w_fu.astype(jnp.bfloat16)
    w_r, w_i = wb[:, :c], wb[:, c:]                                # stacked (2c, c) blocks
    st = fu_conv_stats(xr, xi, w_r, w_i)                           # (n, 2c, 2)
    scale, shift = _bn_fold(st, gamma_fu, beta_fu, n * sf)
    yr, yi = fu_conv_bn_relu(xr, xi, w_r, w_i, scale, shift)       # bf16 (n, c, sfp)
    yr = yr[:, :, :sf].reshape(n, c, h, wf).astype(jnp.float32)
    yi = yi[:, :, :sf].reshape(n, c, h, wf).astype(jnp.float32)
    out = jnp.fft.irfft2(jax.lax.complex(yr, yi), s=(h, w), axes=(2, 3), norm='ortho')
    return out.astype(jnp.float32)


def spectral_transform(x, params):
    """SpectralTransform.forward with stride=1 (downsample=Identity), enable_lfu=False (xs=0)."""
    n, cin, h, w = x.shape
    s = h * w
    sp = _round_up(s, 128)
    cmid = params['w1'].shape[0]
    cout = params['w2'].shape[0]
    x3 = _pad_lanes(x.reshape(n, cin, s), sp)                # NCHW kept; free spatial flatten
    # conv1: 1x1 (no bias) + BN + ReLU  (pass 1: matmul + resident stats; glue fold; pass 2)
    z1, st1 = conv1x1_stats(x3, params['w1'])
    scale1, shift1 = _bn_fold(st1, params['g1'], params['b1'], n * s)
    y1 = bn_relu(z1, scale1, shift1)                         # f32 (n, cmid, sp), FFT input
    # FourierUnit on the unpadded image
    fu_out = fourier_unit(y1[:, :, :s].reshape(n, cmid, h, w),
                          params['w_fu'], params['g_fu'], params['b_fu'])
    fu3 = _pad_lanes(fu_out.reshape(n, cmid, s), sp)
    # conv2: 1x1 (no bias) of (y1 + fu_out); conv1's BN+ReLU is re-derived in-kernel from
    # the bf16 z1 instead of re-reading the f32 y1.
    out = bn_add_conv1x1(z1, fu3, scale1, shift1, params['w2'])
    return out[:, :, :s].reshape(n, cout, h, w)


def init_params(key, in_channels, out_channels):
    cmid = out_channels // 2
    k1, k2, k3 = jax.random.split(key, 3)
    # Weights stored in PyTorch Conv2d layout (Cout, Cin) with the 1x1 kernel dims squeezed.
    w1 = jax.random.normal(k1, (cmid, in_channels), jnp.float32) * math.sqrt(2.0 / in_channels)
    w_fu = jax.random.normal(k2, (2 * cmid, 2 * cmid), jnp.float32) * math.sqrt(2.0 / (2 * cmid))
    w2 = jax.random.normal(k3, (out_channels, cmid), jnp.float32) * math.sqrt(2.0 / cmid)
    # BatchNorm affine params (PyTorch defaults gamma=1, beta=0), stored (C, 1).
    g1 = jnp.ones((cmid, 1), jnp.float32)
    b1 = jnp.zeros((cmid, 1), jnp.float32)
    g_fu = jnp.ones((2 * cmid, 1), jnp.float32)
    b_fu = jnp.zeros((2 * cmid, 1), jnp.float32)
    return dict(w1=w1, g1=g1, b1=b1, w_fu=w_fu, g_fu=g_fu, b_fu=b_fu, w2=w2)


if __name__ == "__main__":
    key = jax.random.PRNGKey(0)
    kx, kp = jax.random.split(key)

    batch, in_channels, out_channels, H, W = 2, 4, 8, 16, 16
    x = jax.random.normal(kx, (batch, in_channels, H, W), jnp.float32)   # NCHW
    params = init_params(kp, in_channels, out_channels)

    fwd = jax.jit(spectral_transform)
    out = jax.block_until_ready(fwd(x, params))

    assert out.shape == (batch, out_channels, H, W), out.shape
    assert bool(jnp.all(jnp.isfinite(out)))
    print("KERNEL_OK")
</pallas_src>

<mosaic_0001>
module attributes {stable_mosaic.version = 11 : i64} {
  func.func @_conv_stats_kernel(%arg0: i32, %arg1: i32, %arg2: memref<1x4x256xf32, #tpu.memory_space<vmem>>, %arg3: memref<4x4xbf16, #tpu.memory_space<vmem>>, %arg4: memref<1x4x256xbf16, #tpu.memory_space<vmem>>, %arg5: memref<1x4x2xf32, #tpu.memory_space<vmem>>) attributes {dimension_semantics = [#tpu.dimension_semantics<parallel>, #tpu.dimension_semantics<arbitrary>], iteration_bounds = array<i64: 2, 1>, scalar_prefetch = 0 : i64, scratch_operands = 0 : i64, tpu.core_type = #tpu.core_type<tc>, window_params = [{transform_indices = @transform_0, window_bounds = array<i64: 1, 4, 256>}, {pipeline_mode = #tpu.pipeline_mode<synchronous>, transform_indices = @transform_1, window_bounds = array<i64: 4, 4>}, {transform_indices = @transform_2, window_bounds = array<i64: 1, 4, 256>}, {transform_indices = @transform_3, window_bounds = array<i64: 1, 4, 2>}]} {
    %c0 = arith.constant 0 : index
    %c0_0 = arith.constant 0 : index
    %c0_1 = arith.constant 0 : index
    %0 = vector.load %arg2[%c0, %c0_0, %c0_1] : memref<1x4x256xf32, #tpu.memory_space<vmem>>, vector<1x4x256xf32>
    %1 = vector.shape_cast %0 : vector<1x4x256xf32> to vector<4x256xf32>
    %2 = arith.truncf %1 : vector<4x256xf32> to vector<4x256xbf16>
    %c0_2 = arith.constant 0 : index
    %c0_3 = arith.constant 0 : index
    %3 = vector.load %arg3[%c0_2, %c0_3] : memref<4x4xbf16, #tpu.memory_space<vmem>>, vector<4x4xbf16>
    %cst = arith.constant dense<0.000000e+00> : vector<4x256xf32>
    %4 = tpu.matmul %3, %2, %cst {dimension_numbers = #tpu.dot_dimension_numbers<[1], [0], [0], [1], [0, 0, 1, 1], [], []>} : vector<4x4xbf16>, vector<4x256xbf16>, vector<4x256xf32> -> vector<4x256xf32>
    %5 = arith.truncf %4 : vector<4x256xf32> to vector<4x256xbf16>
    %c0_4 = arith.constant 0 : index
    %c0_5 = arith.constant 0 : index
    %c0_6 = arith.constant 0 : index
    %6 = vector.load %arg4[%c0_4, %c0_5, %c0_6] : memref<1x4x256xbf16, #tpu.memory_space<vmem>>, vector<1x4x256xbf16>
    %7 = vector.shape_cast %6 : vector<1x4x256xbf16> to vector<4x256xbf16>
    %8 = vector.shape_cast %5 : vector<4x256xbf16> to vector<1x4x256xbf16>
    tpu.vector_store %arg4[%c0_4, %c0_5, %c0_6], %8 {strides = array<i32>} : memref<1x4x256xbf16, #tpu.memory_space<vmem>>, vector<1x4x256xbf16>,
    %cst_7 = arith.constant dense<0.000000e+00> : vector<4xf32>
    %9 = vector.multi_reduction <add>, %4, %cst_7 [1] : vector<4x256xf32> to vector<4xf32>
    %10 = vector.shape_cast %9 : vector<4xf32> to vector<4x1xf32>
    %11 = arith.mulf %4, %4 : vector<4x256xf32>
    %cst_8 = arith.constant dense<0.000000e+00> : vector<4xf32>
    %12 = vector.multi_reduction <add>, %11, %cst_8 [1] : vector<4x256xf32> to vector<4xf32>
    %13 = vector.shape_cast %12 : vector<4xf32> to vector<4x1xf32>
    %14 = tpu.iota {dimensions = array<i32: 1>} : vector<4x2xi32>
    %c0_i32 = arith.constant 0 : i32
    %15 = vector.broadcast %c0_i32 : i32 to vector<4x2xi32>
    %16 = arith.cmpi eq, %14, %15 : vector<4x2xi32>
    %17 = vector.shape_cast %10 : vector<4x1xf32> to vector<4x1xf32>
    %18 = vector.broadcast %17 : vector<4x1xf32> to vector<4x2xf32>
    %19 = vector.shape_cast %13 : vector<4x1xf32> to vector<4x1xf32>
    %20 = vector.broadcast %19 : vector<4x1xf32> to vector<4x2xf32>
    %21 = arith.select %16, %18, %20 : vector<4x2xi1>, vector<4x2xf32>
    %c0_i32_9 = arith.constant 0 : i32
    %22 = arith.cmpi eq, %arg1, %c0_i32_9 : i32
    %23 = arith.extui %22 : i1 to i32
    %c0_i32_10 = arith.constant 0 : i32
    %24 = arith.cmpi ne, %23, %c0_i32_10 : i32
    scf.if %24 {
      %cst_17 = arith.constant 0.000000e+00 : f32
      %31 = vector.broadcast %cst_17 : f32 to vector<4x2xf32>
      %c0_18 = arith.constant 0 : index
      %c0_19 = arith.constant 0 : index
      %c0_20 = arith.constant 0 : index
      %32 = vector.load %arg5[%c0_18, %c0_19, %c0_20] : memref<1x4x2xf32, #tpu.memory_space<vmem>>, vector<1x4x2xf32>
      %33 = vector.shape_cast %32 : vector<1x4x2xf32> to vector<4x2xf32>
      %34 = vector.shape_cast %31 : vector<4x2xf32> to vector<1x4x2xf32>
      tpu.vector_store %arg5[%c0_18, %c0_19, %c0_20], %34 {strides = array<i32>} : memref<1x4x2xf32, #tpu.memory_space<vmem>>, vector<1x4x2xf32>,
    } else {
    }
    %c0_11 = arith.constant 0 : index
    %c0_12 = arith.constant 0 : index
    %c0_13 = arith.constant 0 : index
    %25 = vector.load %arg5[%c0_11, %c0_12, %c0_13] : memref<1x4x2xf32, #tpu.memory_space<vmem>>, vector<1x4x2xf32>
    %26 = vector.shape_cast %25 : vector<1x4x2xf32> to vector<4x2xf32>
    %27 = arith.addf %26, %21 : vector<4x2xf32>
    %c0_14 = arith.constant 0 : index
    %c0_15 = arith.constant 0 : index
    %c0_16 = arith.constant 0 : index
    %28 = vector.load %arg5[%c0_14, %c0_15, %c0_16] : memref<1x4x2xf32, #tpu.memory_space<vmem>>, vector<1x4x2xf32>
    %29 = vector.shape_cast %28 : vector<1x4x2xf32> to vector<4x2xf32>
    %30 = vector.shape_cast %27 : vector<4x2xf32> to vector<1x4x2xf32>
    tpu.vector_store %arg5[%c0_14, %c0_15, %c0_16], %30 {strides = array<i32>} : memref<1x4x2xf32, #tpu.memory_space<vmem>>, vector<1x4x2xf32>,
    return
  }
  func.func @transform_0(%arg0: i32, %arg1: i32) -> (i32, i32, i32) {
    %c0_i32 = arith.constant 0 : i32
    %c0_i32_0 = arith.constant 0 : i32
    return %arg0, %c0_i32, %arg1 : i32, i32, i32
  }
  func.func @transform_1(%arg0: i32, %arg1: i32) -> (i32, i32) {
    %c0_i32 = arith.constant 0 : i32
    %c0_i32_0 = arith.constant 0 : i32
    %c0_i32_1 = arith.constant 0 : i32
    return %c0_i32, %c0_i32_0 : i32, i32
  }
  func.func @transform_2(%arg0: i32, %arg1: i32) -> (i32, i32, i32) {
    %c0_i32 = arith.constant 0 : i32
    %c0_i32_0 = arith.constant 0 : i32
    return %arg0, %c0_i32, %arg1 : i32, i32, i32
  }
  func.func @transform_3(%arg0: i32, %arg1: i32) -> (i32, i32, i32) {
    %c0_i32 = arith.constant 0 : i32
    %c0_i32_0 = arith.constant 0 : i32
    %c0_i32_1 = arith.constant 0 : i32
    return %arg0, %c0_i32, %c0_i32_0 : i32, i32, i32
  }
}

module attributes {stable_mosaic.version = 11 : i64} {
  func.func @_bn_relu_kernel(%arg0: i32, %arg1: i32, %arg2: memref<1x4x256xbf16, #tpu.memory_space<vmem>>, %arg3: memref<4x1xf32, #tpu.memory_space<vmem>>, %arg4: memref<4x1xf32, #tpu.memory_space<vmem>>, %arg5: memref<1x4x256xf32, #tpu.memory_space<vmem>>) attributes {dimension_semantics = [#tpu.dimension_semantics<parallel>, #tpu.dimension_semantics<parallel>], iteration_bounds = array<i64: 2, 1>, scalar_prefetch = 0 : i64, scratch_operands = 0 : i64, tpu.core_type = #tpu.core_type<tc>, window_params = [{transform_indices = @transform_0, window_bounds = array<i64: 1, 4, 256>}, {pipeline_mode = #tpu.pipeline_mode<synchronous>, transform_indices = @transform_1, window_bounds = array<i64: 4, 1>}, {pipeline_mode = #tpu.pipeline_mode<synchronous>, transform_indices = @transform_2, window_bounds = array<i64: 4, 1>}, {transform_indices = @transform_3, window_bounds = array<i64: 1, 4, 256>}]} {
    %c0 = arith.constant 0 : index
    %c0_0 = arith.constant 0 : index
    %c0_1 = arith.constant 0 : index
    %0 = vector.load %arg2[%c0, %c0_0, %c0_1] : memref<1x4x256xbf16, #tpu.memory_space<vmem>>, vector<1x4x256xbf16>
    %1 = vector.shape_cast %0 : vector<1x4x256xbf16> to vector<4x256xbf16>
    %2 = arith.extf %1 : vector<4x256xbf16> to vector<4x256xf32>
    %c0_2 = arith.constant 0 : index
    %c0_3 = arith.constant 0 : index
    %3 = vector.load %arg3[%c0_2, %c0_3] : memref<4x1xf32, #tpu.memory_space<vmem>>, vector<4x1xf32>
    %4 = vector.broadcast %3 : vector<4x1xf32> to vector<4x256xf32>
    %5 = arith.mulf %2, %4 : vector<4x256xf32>
    %c0_4 = arith.constant 0 : index
    %c0_5 = arith.constant 0 : index
    %6 = vector.load %arg4[%c0_4, %c0_5] : memref<4x1xf32, #tpu.memory_space<vmem>>, vector<4x1xf32>
    %7 = vector.broadcast %6 : vector<4x1xf32> to vector<4x256xf32>
    %8 = arith.addf %5, %7 : vector<4x256xf32>
    %cst = arith.constant 0.000000e+00 : f32
    %9 = vector.broadcast %cst : f32 to vector<4x256xf32>
    %10 = arith.maximumf %8, %9 : vector<4x256xf32>
    %c0_6 = arith.constant 0 : index
    %c0_7 = arith.constant 0 : index
    %c0_8 = arith.constant 0 : index
    %11 = vector.load %arg5[%c0_6, %c0_7, %c0_8] : memref<1x4x256xf32, #tpu.memory_space<vmem>>, vector<1x4x256xf32>
    %12 = vector.shape_cast %11 : vector<1x4x256xf32> to vector<4x256xf32>
    %13 = vector.shape_cast %10 : vector<4x256xf32> to vector<1x4x256xf32>
    tpu.vector_store %arg5[%c0_6, %c0_7, %c0_8], %13 {strides = array<i32>} : memref<1x4x256xf32, #tpu.memory_space<vmem>>, vector<1x4x256xf32>,
    return
  }
  func.func @transform_0(%arg0: i32, %arg1: i32) -> (i32, i32, i32) {
    %c0_i32 = arith.constant 0 : i32
    %c0_i32_0 = arith.constant 0 : i32
    return %arg0, %c0_i32, %arg1 : i32, i32, i32
  }
  func.func @transform_1(%arg0: i32, %arg1: i32) -> (i32, i32) {
    %c0_i32 = arith.constant 0 : i32
    %c0_i32_0 = arith.constant 0 : i32
    %c0_i32_1 = arith.constant 0 : i32
    return %c0_i32, %c0_i32_0 : i32, i32
  }
  func.func @transform_2(%arg0: i32, %arg1: i32) -> (i32, i32) {
    %c0_i32 = arith.constant 0 : i32
    %c0_i32_0 = arith.constant 0 : i32
    %c0_i32_1 = arith.constant 0 : i32
    return %c0_i32, %c0_i32_0 : i32, i32
  }
  func.func @transform_3(%arg0: i32, %arg1: i32) -> (i32, i32, i32) {
    %c0_i32 = arith.constant 0 : i32
    %c0_i32_0 = arith.constant 0 : i32
    return %arg0, %c0_i32, %arg1 : i32, i32, i32
  }
}

module attributes {stable_mosaic.version = 11 : i64} {
  func.func @_fu_stats_kernel(%arg0: i32, %arg1: i32, %arg2: memref<1x4x256xbf16, #tpu.memory_space<vmem>>, %arg3: memref<1x4x256xbf16, #tpu.memory_space<vmem>>, %arg4: memref<8x4xbf16, #tpu.memory_space<vmem>>, %arg5: memref<8x4xbf16, #tpu.memory_space<vmem>>, %arg6: memref<1x8x2xf32, #tpu.memory_space<vmem>>) attributes {dimension_semantics = [#tpu.dimension_semantics<parallel>, #tpu.dimension_semantics<arbitrary>], iteration_bounds = array<i64: 2, 1>, scalar_prefetch = 0 : i64, scratch_operands = 0 : i64, tpu.core_type = #tpu.core_type<tc>, window_params = [{transform_indices = @transform_0, window_bounds = array<i64: 1, 4, 256>}, {transform_indices = @transform_1, window_bounds = array<i64: 1, 4, 256>}, {pipeline_mode = #tpu.pipeline_mode<synchronous>, transform_indices = @transform_2, window_bounds = array<i64: 8, 4>}, {pipeline_mode = #tpu.pipeline_mode<synchronous>, transform_indices = @transform_3, window_bounds = array<i64: 8, 4>}, {transform_indices = @transform_4, window_bounds = array<i64: 1, 8, 2>}]} {
    %c0 = arith.constant 0 : index
    %c0_0 = arith.constant 0 : index
    %0 = vector.load %arg4[%c0, %c0_0] : memref<8x4xbf16, #tpu.memory_space<vmem>>, vector<8x4xbf16>
    %c0_1 = arith.constant 0 : index
    %c0_2 = arith.constant 0 : index
    %c0_3 = arith.constant 0 : index
    %1 = vector.load %arg2[%c0_1, %c0_2, %c0_3] : memref<1x4x256xbf16, #tpu.memory_space<vmem>>, vector<1x4x256xbf16>
    %2 = vector.shape_cast %1 : vector<1x4x256xbf16> to vector<4x256xbf16>
    %cst = arith.constant dense<0.000000e+00> : vector<8x256xf32>
    %3 = tpu.matmul %0, %2, %cst {dimension_numbers = #tpu.dot_dimension_numbers<[1], [0], [0], [1], [0, 0, 1, 1], [], []>} : vector<8x4xbf16>, vector<4x256xbf16>, vector<8x256xf32> -> vector<8x256xf32>
    %c0_4 = arith.constant 0 : index
    %c0_5 = arith.constant 0 : index
    %4 = vector.load %arg5[%c0_4, %c0_5] : memref<8x4xbf16, #tpu.memory_space<vmem>>, vector<8x4xbf16>
    %c0_6 = arith.constant 0 : index
    %c0_7 = arith.constant 0 : index
    %c0_8 = arith.constant 0 : index
    %5 = vector.load %arg3[%c0_6, %c0_7, %c0_8] : memref<1x4x256xbf16, #tpu.memory_space<vmem>>, vector<1x4x256xbf16>
    %6 = vector.shape_cast %5 : vector<1x4x256xbf16> to vector<4x256xbf16>
    %cst_9 = arith.constant dense<0.000000e+00> : vector<8x256xf32>
    %7 = tpu.matmul %4, %6, %cst_9 {dimension_numbers = #tpu.dot_dimension_numbers<[1], [0], [0], [1], [0, 0, 1, 1], [], []>} : vector<8x4xbf16>, vector<4x256xbf16>, vector<8x256xf32> -> vector<8x256xf32>
    %8 = arith.addf %3, %7 : vector<8x256xf32>
    %cst_10 = arith.constant dense<0.000000e+00> : vector<8xf32>
    %9 = vector.multi_reduction <add>, %8, %cst_10 [1] : vector<8x256xf32> to vector<8xf32>
    %10 = vector.shape_cast %9 : vector<8xf32> to vector<8x1xf32>
    %11 = arith.mulf %8, %8 : vector<8x256xf32>
    %cst_11 = arith.constant dense<0.000000e+00> : vector<8xf32>
    %12 = vector.multi_reduction <add>, %11, %cst_11 [1] : vector<8x256xf32> to vector<8xf32>
    %13 = vector.shape_cast %12 : vector<8xf32> to vector<8x1xf32>
    %14 = tpu.iota {dimensions = array<i32: 1>} : vector<8x2xi32>
    %c0_i32 = arith.constant 0 : i32
    %15 = vector.broadcast %c0_i32 : i32 to vector<8x2xi32>
    %16 = arith.cmpi eq, %14, %15 : vector<8x2xi32>
    %17 = vector.shape_cast %10 : vector<8x1xf32> to vector<8x1xf32>
    %18 = vector.broadcast %17 : vector<8x1xf32> to vector<8x2xf32>
    %19 = vector.shape_cast %13 : vector<8x1xf32> to vector<8x1xf32>
    %20 = vector.broadcast %19 : vector<8x1xf32> to vector<8x2xf32>
    %21 = arith.select %16, %18, %20 : vector<8x2xi1>, vector<8x2xf32>
    %c0_i32_12 = arith.constant 0 : i32
    %22 = arith.cmpi eq, %arg1, %c0_i32_12 : i32
    %23 = arith.extui %22 : i1 to i32
    %c0_i32_13 = arith.constant 0 : i32
    %24 = arith.cmpi ne, %23, %c0_i32_13 : i32
    scf.if %24 {
      %cst_20 = arith.constant 0.000000e+00 : f32
      %31 = vector.broadcast %cst_20 : f32 to vector<8x2xf32>
      %c0_21 = arith.constant 0 : index
      %c0_22 = arith.constant 0 : index
      %c0_23 = arith.constant 0 : index
      %32 = vector.load %arg6[%c0_21, %c0_22, %c0_23] : memref<1x8x2xf32, #tpu.memory_space<vmem>>, vector<1x8x2xf32>
      %33 = vector.shape_cast %32 : vector<1x8x2xf32> to vector<8x2xf32>
      %34 = vector.shape_cast %31 : vector<8x2xf32> to vector<1x8x2xf32>
      tpu.vector_store %arg6[%c0_21, %c0_22, %c0_23], %34 {strides = array<i32>} : memref<1x8x2xf32, #tpu.memory_space<vmem>>, vector<1x8x2xf32>,
    } else {
    }
    %c0_14 = arith.constant 0 : index
    %c0_15 = arith.constant 0 : index
    %c0_16 = arith.constant 0 : index
    %25 = vector.load %arg6[%c0_14, %c0_15, %c0_16] : memref<1x8x2xf32, #tpu.memory_space<vmem>>, vector<1x8x2xf32>
    %26 = vector.shape_cast %25 : vector<1x8x2xf32> to vector<8x2xf32>
    %27 = arith.addf %26, %21 : vector<8x2xf32>
    %c0_17 = arith.constant 0 : index
    %c0_18 = arith.constant 0 : index
    %c0_19 = arith.constant 0 : index
    %28 = vector.load %arg6[%c0_17, %c0_18, %c0_19] : memref<1x8x2xf32, #tpu.memory_space<vmem>>, vector<1x8x2xf32>
    %29 = vector.shape_cast %28 : vector<1x8x2xf32> to vector<8x2xf32>
    %30 = vector.shape_cast %27 : vector<8x2xf32> to vector<1x8x2xf32>
    tpu.vector_store %arg6[%c0_17, %c0_18, %c0_19], %30 {strides = array<i32>} : memref<1x8x2xf32, #tpu.memory_space<vmem>>, vector<1x8x2xf32>,
    return
  }
  func.func @transform_0(%arg0: i32, %arg1: i32) -> (i32, i32, i32) {
    %c0_i32 = arith.constant 0 : i32
    %c0_i32_0 = arith.constant 0 : i32
    return %arg0, %c0_i32, %arg1 : i32, i32, i32
  }
  func.func @transform_1(%arg0: i32, %arg1: i32) -> (i32, i32, i32) {
    %c0_i32 = arith.constant 0 : i32
    %c0_i32_0 = arith.constant 0 : i32
    return %arg0, %c0_i32, %arg1 : i32, i32, i32
  }
  func.func @transform_2(%arg0: i32, %arg1: i32) -> (i32, i32) {
    %c0_i32 = arith.constant 0 : i32
    %c0_i32_0 = arith.constant 0 : i32
    %c0_i32_1 = arith.constant 0 : i32
    return %c0_i32, %c0_i32_0 : i32, i32
  }
  func.func @transform_3(%arg0: i32, %arg1: i32) -> (i32, i32) {
    %c0_i32 = arith.constant 0 : i32
    %c0_i32_0 = arith.constant 0 : i32
    %c0_i32_1 = arith.constant 0 : i32
    return %c0_i32, %c0_i32_0 : i32, i32
  }
  func.func @transform_4(%arg0: i32, %arg1: i32) -> (i32, i32, i32) {
    %c0_i32 = arith.constant 0 : i32
    %c0_i32_0 = arith.constant 0 : i32
    %c0_i32_1 = arith.constant 0 : i32
    return %arg0, %c0_i32, %c0_i32_0 : i32, i32, i32
  }
}

module attributes {stable_mosaic.version = 11 : i64} {
  func.func @_fu_conv_bn_relu_kernel(%arg0: i32, %arg1: i32, %arg2: memref<1x4x256xbf16, #tpu.memory_space<vmem>>, %arg3: memref<1x4x256xbf16, #tpu.memory_space<vmem>>, %arg4: memref<8x4xbf16, #tpu.memory_space<vmem>>, %arg5: memref<8x4xbf16, #tpu.memory_space<vmem>>, %arg6: memref<8x1xf32, #tpu.memory_space<vmem>>, %arg7: memref<8x1xf32, #tpu.memory_space<vmem>>, %arg8: memref<1x4x256xbf16, #tpu.memory_space<vmem>>, %arg9: memref<1x4x256xbf16, #tpu.memory_space<vmem>>) attributes {dimension_semantics = [#tpu.dimension_semantics<parallel>, #tpu.dimension_semantics<parallel>], iteration_bounds = array<i64: 2, 1>, scalar_prefetch = 0 : i64, scratch_operands = 0 : i64, tpu.core_type = #tpu.core_type<tc>, window_params = [{transform_indices = @transform_0, window_bounds = array<i64: 1, 4, 256>}, {transform_indices = @transform_1, window_bounds = array<i64: 1, 4, 256>}, {pipeline_mode = #tpu.pipeline_mode<synchronous>, transform_indices = @transform_2, window_bounds = array<i64: 8, 4>}, {pipeline_mode = #tpu.pipeline_mode<synchronous>, transform_indices = @transform_3, window_bounds = array<i64: 8, 4>}, {pipeline_mode = #tpu.pipeline_mode<synchronous>, transform_indices = @transform_4, window_bounds = array<i64: 8, 1>}, {pipeline_mode = #tpu.pipeline_mode<synchronous>, transform_indices = @transform_5, window_bounds = array<i64: 8, 1>}, {transform_indices = @transform_6, window_bounds = array<i64: 1, 4, 256>}, {transform_indices = @transform_7, window_bounds = array<i64: 1, 4, 256>}]} {
    %c0 = arith.constant 0 : index
    %c0_0 = arith.constant 0 : index
    %0 = vector.load %arg4[%c0, %c0_0] : memref<8x4xbf16, #tpu.memory_space<vmem>>, vector<8x4xbf16>
    %c0_1 = arith.constant 0 : index
    %c0_2 = arith.constant 0 : index
    %c0_3 = arith.constant 0 : index
    %1 = vector.load %arg2[%c0_1, %c0_2, %c0_3] : memref<1x4x256xbf16, #tpu.memory_space<vmem>>, vector<1x4x256xbf16>
    %2 = vector.shape_cast %1 : vector<1x4x256xbf16> to vector<4x256xbf16>
    %cst = arith.constant dense<0.000000e+00> : vector<8x256xf32>
    %3 = tpu.matmul %0, %2, %cst {dimension_numbers = #tpu.dot_dimension_numbers<[1], [0], [0], [1], [0, 0, 1, 1], [], []>} : vector<8x4xbf16>, vector<4x256xbf16>, vector<8x256xf32> -> vector<8x256xf32>
    %c0_4 = arith.constant 0 : index
    %c0_5 = arith.constant 0 : index
    %4 = vector.load %arg5[%c0_4, %c0_5] : memref<8x4xbf16, #tpu.memory_space<vmem>>, vector<8x4xbf16>
    %c0_6 = arith.constant 0 : index
    %c0_7 = arith.constant 0 : index
    %c0_8 = arith.constant 0 : index
    %5 = vector.load %arg3[%c0_6, %c0_7, %c0_8] : memref<1x4x256xbf16, #tpu.memory_space<vmem>>, vector<1x4x256xbf16>
    %6 = vector.shape_cast %5 : vector<1x4x256xbf16> to vector<4x256xbf16>
    %cst_9 = arith.constant dense<0.000000e+00> : vector<8x256xf32>
    %7 = tpu.matmul %4, %6, %cst_9 {dimension_numbers = #tpu.dot_dimension_numbers<[1], [0], [0], [1], [0, 0, 1, 1], [], []>} : vector<8x4xbf16>, vector<4x256xbf16>, vector<8x256xf32> -> vector<8x256xf32>
    %8 = arith.addf %3, %7 : vector<8x256xf32>
    %c0_10 = arith.constant 0 : index
    %c0_11 = arith.constant 0 : index
    %9 = vector.load %arg6[%c0_10, %c0_11] : memref<8x1xf32, #tpu.memory_space<vmem>>, vector<8x1xf32>
    %10 = vector.broadcast %9 : vector<8x1xf32> to vector<8x256xf32>
    %11 = arith.mulf %8, %10 : vector<8x256xf32>
    %c0_12 = arith.constant 0 : index
    %c0_13 = arith.constant 0 : index
    %12 = vector.load %arg7[%c0_12, %c0_13] : memref<8x1xf32, #tpu.memory_space<vmem>>, vector<8x1xf32>
    %13 = vector.broadcast %12 : vector<8x1xf32> to vector<8x256xf32>
    %14 = arith.addf %11, %13 : vector<8x256xf32>
    %cst_14 = arith.constant 0.000000e+00 : f32
    %15 = vector.broadcast %cst_14 : f32 to vector<8x256xf32>
    %16 = arith.maximumf %14, %15 : vector<8x256xf32>
    %17 = vector.extract_strided_slice %16 {offsets = [0, 0], sizes = [4, 256], strides = [1, 1]} : vector<8x256xf32> to vector<4x256xf32>
    %18 = arith.truncf %17 : vector<4x256xf32> to vector<4x256xbf16>
    %c0_15 = arith.constant 0 : index
    %c0_16 = arith.constant 0 : index
    %c0_17 = arith.constant 0 : index
    %19 = vector.load %arg8[%c0_15, %c0_16, %c0_17] : memref<1x4x256xbf16, #tpu.memory_space<vmem>>, vector<1x4x256xbf16>
    %20 = vector.shape_cast %19 : vector<1x4x256xbf16> to vector<4x256xbf16>
    %21 = vector.shape_cast %18 : vector<4x256xbf16> to vector<1x4x256xbf16>
    tpu.vector_store %arg8[%c0_15, %c0_16, %c0_17], %21 {strides = array<i32>} : memref<1x4x256xbf16, #tpu.memory_space<vmem>>, vector<1x4x256xbf16>,
    %22 = vector.extract_strided_slice %16 {offsets = [4, 0], sizes = [4, 256], strides = [1, 1]} : vector<8x256xf32> to vector<4x256xf32>
    %23 = arith.truncf %22 : vector<4x256xf32> to vector<4x256xbf16>
    %c0_18 = arith.constant 0 : index
    %c0_19 = arith.constant 0 : index
    %c0_20 = arith.constant 0 : index
    %24 = vector.load %arg9[%c0_18, %c0_19, %c0_20] : memref<1x4x256xbf16, #tpu.memory_space<vmem>>, vector<1x4x256xbf16>
    %25 = vector.shape_cast %24 : vector<1x4x256xbf16> to vector<4x256xbf16>
    %26 = vector.shape_cast %23 : vector<4x256xbf16> to vector<1x4x256xbf16>
    tpu.vector_store %arg9[%c0_18, %c0_19, %c0_20], %26 {strides = array<i32>} : memref<1x4x256xbf16, #tpu.memory_space<vmem>>, vector<1x4x256xbf16>,
    return
  }
  func.func @transform_0(%arg0: i32, %arg1: i32) -> (i32, i32, i32) {
    %c0_i32 = arith.constant 0 : i32
    %c0_i32_0 = arith.constant 0 : i32
    return %arg0, %c0_i32, %arg1 : i32, i32, i32
  }
  func.func @transform_1(%arg0: i32, %arg1: i32) -> (i32, i32, i32) {
    %c0_i32 = arith.constant 0 : i32
    %c0_i32_0 = arith.constant 0 : i32
    return %arg0, %c0_i32, %arg1 : i32, i32, i32
  }
  func.func @transform_2(%arg0: i32, %arg1: i32) -> (i32, i32) {
    %c0_i32 = arith.constant 0 : i32
    %c0_i32_0 = arith.constant 0 : i32
    %c0_i32_1 = arith.constant 0 : i32
    return %c0_i32, %c0_i32_0 : i32, i32
  }
  func.func @transform_3(%arg0: i32, %arg1: i32) -> (i32, i32) {
    %c0_i32 = arith.constant 0 : i32
    %c0_i32_0 = arith.constant 0 : i32
    %c0_i32_1 = arith.constant 0 : i32
    return %c0_i32, %c0_i32_0 : i32, i32
  }
  func.func @transform_4(%arg0: i32, %arg1: i32) -> (i32, i32) {
    %c0_i32 = arith.constant 0 : i32
    %c0_i32_0 = arith.constant 0 : i32
    %c0_i32_1 = arith.constant 0 : i32
    return %c0_i32, %c0_i32_0 : i32, i32
  }
  func.func @transform_5(%arg0: i32, %arg1: i32) -> (i32, i32) {
    %c0_i32 = arith.constant 0 : i32
    %c0_i32_0 = arith.constant 0 : i32
    %c0_i32_1 = arith.constant 0 : i32
    return %c0_i32, %c0_i32_0 : i32, i32
  }
  func.func @transform_6(%arg0: i32, %arg1: i32) -> (i32, i32, i32) {
    %c0_i32 = arith.constant 0 : i32
    %c0_i32_0 = arith.constant 0 : i32
    return %arg0, %c0_i32, %arg1 : i32, i32, i32
  }
  func.func @transform_7(%arg0: i32, %arg1: i32) -> (i32, i32, i32) {
    %c0_i32 = arith.constant 0 : i32
    %c0_i32_0 = arith.constant 0 : i32
    return %arg0, %c0_i32, %arg1 : i32, i32, i32
  }
}

module attributes {stable_mosaic.version = 11 : i64} {
  func.func @_bn_add_conv_kernel(%arg0: i32, %arg1: i32, %arg2: memref<1x4x256xbf16, #tpu.memory_space<vmem>>, %arg3: memref<1x4x256xf32, #tpu.memory_space<vmem>>, %arg4: memref<4x1xf32, #tpu.memory_space<vmem>>, %arg5: memref<4x1xf32, #tpu.memory_space<vmem>>, %arg6: memref<8x4xbf16, #tpu.memory_space<vmem>>, %arg7: memref<1x8x256xf32, #tpu.memory_space<vmem>>) attributes {dimension_semantics = [#tpu.dimension_semantics<parallel>, #tpu.dimension_semantics<parallel>], iteration_bounds = array<i64: 2, 1>, scalar_prefetch = 0 : i64, scratch_operands = 0 : i64, tpu.core_type = #tpu.core_type<tc>, window_params = [{transform_indices = @transform_0, window_bounds = array<i64: 1, 4, 256>}, {transform_indices = @transform_1, window_bounds = array<i64: 1, 4, 256>}, {pipeline_mode = #tpu.pipeline_mode<synchronous>, transform_indices = @transform_2, window_bounds = array<i64: 4, 1>}, {pipeline_mode = #tpu.pipeline_mode<synchronous>, transform_indices = @transform_3, window_bounds = array<i64: 4, 1>}, {pipeline_mode = #tpu.pipeline_mode<synchronous>, transform_indices = @transform_4, window_bounds = array<i64: 8, 4>}, {transform_indices = @transform_5, window_bounds = array<i64: 1, 8, 256>}]} {
    %c0 = arith.constant 0 : index
    %c0_0 = arith.constant 0 : index
    %c0_1 = arith.constant 0 : index
    %0 = vector.load %arg2[%c0, %c0_0, %c0_1] : memref<1x4x256xbf16, #tpu.memory_space<vmem>>, vector<1x4x256xbf16>
    %1 = vector.shape_cast %0 : vector<1x4x256xbf16> to vector<4x256xbf16>
    %2 = arith.extf %1 : vector<4x256xbf16> to vector<4x256xf32>
    %c0_2 = arith.constant 0 : index
    %c0_3 = arith.constant 0 : index
    %3 = vector.load %arg4[%c0_2, %c0_3] : memref<4x1xf32, #tpu.memory_space<vmem>>, vector<4x1xf32>
    %4 = vector.broadcast %3 : vector<4x1xf32> to vector<4x256xf32>
    %5 = arith.mulf %2, %4 : vector<4x256xf32>
    %c0_4 = arith.constant 0 : index
    %c0_5 = arith.constant 0 : index
    %6 = vector.load %arg5[%c0_4, %c0_5] : memref<4x1xf32, #tpu.memory_space<vmem>>, vector<4x1xf32>
    %7 = vector.broadcast %6 : vector<4x1xf32> to vector<4x256xf32>
    %8 = arith.addf %5, %7 : vector<4x256xf32>
    %cst = arith.constant 0.000000e+00 : f32
    %9 = vector.broadcast %cst : f32 to vector<4x256xf32>
    %10 = arith.maximumf %8, %9 : vector<4x256xf32>
    %c0_6 = arith.constant 0 : index
    %c0_7 = arith.constant 0 : index
    %c0_8 = arith.constant 0 : index
    %11 = vector.load %arg3[%c0_6, %c0_7, %c0_8] : memref<1x4x256xf32, #tpu.memory_space<vmem>>, vector<1x4x256xf32>
    %12 = vector.shape_cast %11 : vector<1x4x256xf32> to vector<4x256xf32>
    %13 = arith.addf %10, %12 : vector<4x256xf32>
    %14 = arith.truncf %13 : vector<4x256xf32> to vector<4x256xbf16>
    %c0_9 = arith.constant 0 : index
    %c0_10 = arith.constant 0 : index
    %15 = vector.load %arg6[%c0_9, %c0_10] : memref<8x4xbf16, #tpu.memory_space<vmem>>, vector<8x4xbf16>
    %cst_11 = arith.constant dense<0.000000e+00> : vector<8x256xf32>
    %16 = tpu.matmul %15, %14, %cst_11 {dimension_numbers = #tpu.dot_dimension_numbers<[1], [0], [0], [1], [0, 0, 1, 1], [], []>} : vector<8x4xbf16>, vector<4x256xbf16>, vector<8x256xf32> -> vector<8x256xf32>
    %c0_12 = arith.constant 0 : index
    %c0_13 = arith.constant 0 : index
    %c0_14 = arith.constant 0 : index
    %17 = vector.load %arg7[%c0_12, %c0_13, %c0_14] : memref<1x8x256xf32, #tpu.memory_space<vmem>>, vector<1x8x256xf32>
    %18 = vector.shape_cast %17 : vector<1x8x256xf32> to vector<8x256xf32>
    %19 = vector.shape_cast %16 : vector<8x256xf32> to vector<1x8x256xf32>
    tpu.vector_store %arg7[%c0_12, %c0_13, %c0_14], %19 {strides = array<i32>} : memref<1x8x256xf32, #tpu.memory_space<vmem>>, vector<1x8x256xf32>,
    return
  }
  func.func @transform_0(%arg0: i32, %arg1: i32) -> (i32, i32, i32) {
    %c0_i32 = arith.constant 0 : i32
    %c0_i32_0 = arith.constant 0 : i32
    return %arg0, %c0_i32, %arg1 : i32, i32, i32
  }
  func.func @transform_1(%arg0: i32, %arg1: i32) -> (i32, i32, i32) {
    %c0_i32 = arith.constant 0 : i32
    %c0_i32_0 = arith.constant 0 : i32
    return %arg0, %c0_i32, %arg1 : i32, i32, i32
  }
  func.func @transform_2(%arg0: i32, %arg1: i32) -> (i32, i32) {
    %c0_i32 = arith.constant 0 : i32
    %c0_i32_0 = arith.constant 0 : i32
    %c0_i32_1 = arith.constant 0 : i32
    return %c0_i32, %c0_i32_0 : i32, i32
  }
  func.func @transform_3(%arg0: i32, %arg1: i32) -> (i32, i32) {
    %c0_i32 = arith.constant 0 : i32
    %c0_i32_0 = arith.constant 0 : i32
    %c0_i32_1 = arith.constant 0 : i32
    return %c0_i32, %c0_i32_0 : i32, i32
  }
  func.func @transform_4(%arg0: i32, %arg1: i32) -> (i32, i32) {
    %c0_i32 = arith.constant 0 : i32
    %c0_i32_0 = arith.constant 0 : i32
    %c0_i32_1 = arith.constant 0 : i32
    return %c0_i32, %c0_i32_0 : i32, i32
  }
  func.func @transform_5(%arg0: i32, %arg1: i32) -> (i32, i32, i32) {
    %c0_i32 = arith.constant 0 : i32
    %c0_i32_0 = arith.constant 0 : i32
    return %arg0, %c0_i32, %arg1 : i32, i32, i32
  }
}

</mosaic_0001>

<llo_original>
// kernel: spectral_transform.6
$region0: #{spectral_transform.6}
  #allocation0 [shape = 'u32[]', space=smem, size = 0x4, offset = 0x4, fixed_abs, tag = 'smem constant byte address 0x4 - core index']
  #allocation1 [shape = 'u32[144,128]{1,0:T(1,128)}', space=vmem, size = 0x12000, scoped, tag = 'internal scratch']
  %s0 = inlined_call_operand.vmem [shape: bf16[2,4,256], index: 0, kind: input, shape index: {}]
  %s1 = inlined_call_operand.vmem [shape: f32[4,1], index: 1, kind: input, shape index: {}]
  %s2 = inlined_call_operand.vmem [shape: f32[4,1], index: 2, kind: input, shape index: {}]
  %s3 = inlined_call_operand.vmem [shape: f32[2,4,256], index: 3, kind: output, shape index: {}]
  %s4 = sld [smem:[#allocation0]]
  $region45: #{spectral_transform.6} parent=0
    _
  %s6 = ssub.s32 1, %s4
  %s7 = scalar_select 0, %s6, %s4
  loop: start=0, step=1, limit=4
  $region2: #{spectral_transform.6} parent=0 // loop_pre_header
    _
  $region3: #{spectral_transform.6} parent=0 // loop_header
    %s9 = sphi 0, %s13
    %p10 = scmp.ge.s32.totalorder %s9, 4
    %s16 = sphi 0, %s28
    %s17 = sphi 0, %s24
    %s18 = sphi 0, %s16
    %s19 = sphi 0, %s17
    %s20 = sphi 0, %s18
    %s21 = sphi 0, %s19
    %s33 = sphi 0, %s35
    %s36 = sphi 0, %s33
    %s37 = sphi 0, %s36
    %s53 = sphi 0, %s37
    %s57 = sphi 0, %s57
    %s59 = sphi 0, %s57
    %s60 = sphi 0, %s59
    %s74 = sphi 0, %s60
    %s78 = sphi 0, %s78
    %s80 = sphi 0, %s78
    %s81 = sphi 0, %s80
    %s95 = sphi 0, %s81
    %s103 = sphi 0, %s105
    %s106 = sphi 0, %s103
    %s107 = sphi 0, %s106
    %s123 = sphi 0, %s107
  $region4: #{spectral_transform.6} parent=0 // loop_header_branch
    %12 = sbr.rel (%p10) target = $region8
  $region5: #{spectral_transform.6} parent=0 // loop_body
    %s14 = ssub.s32 %s9, 1
    %s15 = ssub.s32 %s9, 2
    %s22 = sadd.s32 1, %s17
    %p23 = scmp.ge.s32.totalorder %s22, 1
    %s24 = scalar_select %p23, 0, %s22
    %s25 = sadd.s32 1, %s16
    %s26 = scalar_select %p23, %s25, %s16
    %p27 = scmp.ge.s32.totalorder %s26, 2
    %s28 = scalar_select %p27, 0, %s26
    %s29 = ssub.s32 %s16, %s28
    %s30 = ssub.s32 %s17, %s24
    %s31 = sor.u32 %s29, %s30
    %p32 = scmp.eq.s32.totalorder %s31, 0
    %s34 = sadd.s32 %s33, 1
    %s35 = scalar_select %p32, %s33, %s34
    %p38 = pneg %p32
    %p39 = scmp.eq.s32.totalorder %s9, 1
    %p40 = por %p38, %p39
    %p41 = scmp.ne.s32.totalorder %s33, %s36
    %p42 = scmp.eq.s32.totalorder %s9, 0
    %p43 = por %p41, %p42
    %p44 = scmp.ne.s32.totalorder %s33, %s36
    %p45 = scmp.eq.s32.totalorder %s14, 1
    %p46 = por %p44, %p45
    %p47 = scmp.ne.s32.totalorder %s36, %s37
    %p48 = scmp.eq.s32.totalorder %s14, 0
    %p49 = por %p47, %p48
    %p50 = scmp.ne.s32.totalorder %s36, %s37
    %p51 = scmp.eq.s32.totalorder %s15, 1
    %p52 = por %p50, %p51
    %p54 = scmp.ne.s32.totalorder %s37, %s53
    %p55 = scmp.eq.s32.totalorder %s15, 0
    %p56 = por %p54, %p55
    %s58 = sadd.s32 %s57, 1
    %p61 = scmp.eq.s32.totalorder %s9, 1
    %p62 = scmp.ne.s32.totalorder %s57, %s59
    %p63 = scmp.eq.s32.totalorder %s9, 0
    %p64 = por %p62, %p63
    %p65 = scmp.ne.s32.totalorder %s57, %s59
    %p66 = scmp.eq.s32.totalorder %s14, 1
    %p67 = por %p65, %p66
    %p68 = scmp.ne.s32.totalorder %s59, %s60
    %p69 = scmp.eq.s32.totalorder %s14, 0
    %p70 = por %p68, %p69
    %p71 = scmp.ne.s32.totalorder %s59, %s60
    %p72 = scmp.eq.s32.totalorder %s15, 1
    %p73 = por %p71, %p72
    %p75 = scmp.ne.s32.totalorder %s60, %s74
    %p76 = scmp.eq.s32.totalorder %s15, 0
    %p77 = por %p75, %p76
    %s79 = sadd.s32 %s78, 1
    %p82 = scmp.eq.s32.totalorder %s9, 1
    %p83 = scmp.ne.s32.totalorder %s78, %s80
    %p84 = scmp.eq.s32.totalorder %s9, 0
    %p85 = por %p83, %p84
    %p86 = scmp.ne.s32.totalorder %s78, %s80
    %p87 = scmp.eq.s32.totalorder %s14, 1
    %p88 = por %p86, %p87
    %p89 = scmp.ne.s32.totalorder %s80, %s81
    %p90 = scmp.eq.s32.totalorder %s14, 0
    %p91 = por %p89, %p90
    %p92 = scmp.ne.s32.totalorder %s80, %s81
    %p93 = scmp.eq.s32.totalorder %s15, 1
    %p94 = por %p92, %p93
    %p96 = scmp.ne.s32.totalorder %s81, %s95
    %p97 = scmp.eq.s32.totalorder %s15, 0
    %p98 = por %p96, %p97
    %s99 = ssub.s32 %s16, %s28
    %s100 = ssub.s32 %s17, %s24
    %s101 = sor.u32 %s99, %s100
    %p102 = scmp.eq.s32.totalorder %s101, 0
    %s104 = sadd.s32 %s103, 1
    %s105 = scalar_select %p102, %s103, %s104
    %p108 = pneg %p102
    %p109 = scmp.eq.s32.totalorder %s9, 1
    %p110 = por %p108, %p109
    %p111 = scmp.ne.s32.totalorder %s103, %s106
    %p112 = scmp.eq.s32.totalorder %s9, 0
    %p113 = por %p111, %p112
    %p114 = scmp.ne.s32.totalorder %s103, %s106
    %p115 = scmp.eq.s32.totalorder %s14, 1
    %p116 = por %p114, %p115
    %p117 = scmp.ne.s32.totalorder %s106, %s107
    %p118 = scmp.eq.s32.totalorder %s14, 0
    %p119 = por %p117, %p118
    %p120 = scmp.ne.s32.totalorder %s106, %s107
    %p121 = scmp.eq.s32.totalorder %s15, 1
    %p122 = por %p120, %p121
    %p124 = scmp.ne.s32.totalorder %s107, %s123
    %p125 = scmp.eq.s32.totalorder %s15, 0
    %p126 = por %p124, %p125
    %p127 = scmp.le.s32.totalorder 1, %s9
    %p128 = scmp.lt.s32.totalorder %s9, 3
    %p129 = pnand %p127, %p128
    %p130 = pneg %p129
    // Predicated region
    $region9: #{spectral_transform.6} parent=5 // pred_check
      _
    $region10: #{spectral_transform.6} parent=5 // pred_check_branch
      %132 = sbr.rel (%p129) target = $region12
    $region11: #{spectral_transform.6} parent=5 // pred_region
      %s133 = ssub.s32 %s9, 1
      // Predicated region
      $region13: #{spectral_transform.6} parent=11 // pred_check
        %p134 = pneg %p70
      $region14: #{spectral_transform.6} parent=11 // pred_check_branch
        %136 = sbr.rel (%p134) target = $region16
      $region15: #{spectral_transform.6} parent=11 // pred_region
        _
      $region16: #{spectral_transform.6} parent=11 // pred_fallthru
        _
      // Predicated region
      $region17: #{spectral_transform.6} parent=11 // pred_check
        %p137 = pneg %p91
      $region18: #{spectral_transform.6} parent=11 // pred_check_branch
        %139 = sbr.rel (%p137) target = $region20
      $region19: #{spectral_transform.6} parent=11 // pred_region
        _
      $region20: #{spectral_transform.6} parent=11 // pred_fallthru
        _
    $region12: #{spectral_transform.6} parent=5 // pred_fallthru
      _
    %p140 = scmp.lt.s32.totalorder %s9, 2
    // Predicated region
    $region21: #{spectral_transform.6} parent=5 // pred_check
      %p141 = pneg %p140
    $region22: #{spectral_transform.6} parent=5 // pred_check_branch
      %143 = sbr.rel (%p141) target = $region24
    $region23: #{spectral_transform.6} parent=5 // pred_region
      // Predicated region
      $region25: #{spectral_transform.6} parent=23 // pred_check
        %p144 = pneg %p43
      $region26: #{spectral_transform.6} parent=23 // pred_check_branch
        %146 = sbr.rel (%p144) target = $region28
      $region27: #{spectral_transform.6} parent=23 // pred_region
        %s147 = smul.u32 2, %s17
        %p148 = scmp.lt.s32.totalorder %s16, 1
        %s149 = scalar_select %p148, %s16, 1
        %p150 = scmp.lt.s32.totalorder %s147, 1
        %s151 = scalar_select %p150, %s147, 1
        %s152 = smul.addr %s149, 2
        %s153 = sadd.s32 %s151, %s152
        %s154 = smul.addr %s153, 2
        %s155 = scalar_lea.vmem %s0, %s154
        %s156 = smul.u32 2, %s17
      $region28: #{spectral_transform.6} parent=23 // pred_fallthru
        _
    $region24: #{spectral_transform.6} parent=5 // pred_fallthru
      _
    %p157 = scmp.le.s32.totalorder 1, %s9
    %p158 = scmp.lt.s32.totalorder %s9, 3
    %p159 = pnand %p157, %p158
    %p160 = pneg %p159
    // Predicated region
    $region29: #{spectral_transform.6} parent=5 // pred_check
      _
    $region30: #{spectral_transform.6} parent=5 // pred_check_branch
      %162 = sbr.rel (%p159) target = $region32
    $region31: #{spectral_transform.6} parent=5 // pred_region
      %s163 = ssub.s32 %s9, 1
      %s164 = smul.u32 2, %s19
      %p165 = scmp.lt.s32.totalorder %s18, 1
      %s166 = scalar_select %p165, %s18, 1
      %p167 = scmp.lt.s32.totalorder %s164, 1
      %s168 = scalar_select %p167, %s164, 1
      %s169 = smul.addr %s166, 2
      %s170 = sadd.s32 %s168, %s169
      %s171 = smul.addr %s170, 2
      %s172 = scalar_lea.vmem %s0, %s171
      %p173 = pneg %p49
      %p174 = pneg %p46
      %p175 = pneg %p70
      %p176 = pneg %p67
      %p177 = pneg %p91
      %p178 = pneg %p88
      %p179 = pneg %p119
      %p180 = pneg %p116
      %s181 = smul.u32 2, %s19
      %p182 = scmp.lt.s32.totalorder %s18, 1
      %s183 = scalar_select %p182, %s18, 1
      %p184 = scmp.lt.s32.totalorder %s181, 1
      %s185 = scalar_select %p184, %s181, 1
      %s186 = smul.addr %s183, 2
      %s187 = sadd.s32 %s185, %s186
      %s188 = smul.addr %s187, 4
      %s189 = scalar_lea.vmem %s3, %s188
      %s190 = smul.u32 2, %s19
      %p191 = scmp.lt.s32.totalorder %s18, 1
      %s192 = scalar_select %p191, %s18, 1
      %p193 = scmp.lt.s32.totalorder %s190, 1
      %s194 = scalar_select %p193, %s190, 1
      %s195 = smul.addr %s192, 2
      %s196 = sadd.s32 %s194, %s195
      %s197 = smul.addr %s196, 2
      %s198 = scalar_lea.vmem %s0, %s197
      %s199 = smul.u32 2, %s19
      %s200 = smul.u32 2, %s19
      %p201 = scmp.lt.s32.totalorder %s18, 1
      %s202 = scalar_select %p201, %s18, 1
      %p203 = scmp.lt.s32.totalorder %s200, 1
      %s204 = scalar_select %p203, %s200, 1
      %s205 = smul.addr %s202, 2
      %s206 = sadd.s32 %s204, %s205
      %s207 = smul.addr %s206, 4
      %s208 = scalar_lea.vmem %s3, %s207
      %s209 = smul.u32 2, %s19
      %v210 = vld [vmem:[%s198] sm:$0xf]
      %v211 = vunpack.c.l.bf16 %v210
      %v212 = vld [vmem:[%s1] sm:$0xf]
      %214 = vset.pattern.permute.xlu0 0
      %215 = vperm.xlu0 %214, %v212
      %v216 = vpop.permute.xlu0 %215
      %v218 = vunpack.c.l.s4 839922192
      %v219 = vunpack.c.0.s8 %v218
      %v220 = vlaneseq
      %v221 = vshrl.u32 %v220, 7
      %v222 = vsub.s32 %v219, %v221
      %v223 = vrot.slane %v216, %v222
      %v225 = vmul.f32 %v211, %v223
      %v226 = vld [vmem:[%s2] sm:$0xf]
      %228 = vset.pattern.permute.xlu0 0
      %229 = vperm.xlu0 %228, %v226
      %v230 = vpop.permute.xlu0 %229
      %v232 = vunpack.c.l.s4 839922192
      %v233 = vunpack.c.0.s8 %v232
      %v234 = vlaneseq
      %v235 = vshrl.u32 %v234, 7
      %v236 = vsub.s32 %v233, %v235
      %v237 = vrot.slane %v230, %v236
      %v239 = vadd.f32 %v225, %v237
      %v240 = vmax.f32 %v239, 0.0
      %241 = vst [vmem:[%s208] sm:$0xff] %v240
      %s242 = smul.u32 2, %s19
      %p243 = scmp.lt.s32.totalorder %s18, 1
      %s244 = scalar_select %p243, %s18, 1
      %p245 = scmp.lt.s32.totalorder %s242, 1
      %s246 = scalar_select %p245, %s242, 1
      %s247 = smul.addr %s244, 2
      %s248 = sadd.s32 %s246, %s247
      %s249 = smul.addr %s248, 4
      %s250 = scalar_lea.vmem %s3, %s249
      // Predicated region
      $region33: #{spectral_transform.6} parent=31 // pred_check
        %p251 = pneg %p116
      $region34: #{spectral_transform.6} parent=31 // pred_check_branch
        %253 = sbr.rel (%p251) target = $region36
      $region35: #{spectral_transform.6} parent=31 // pred_region
        %s254 = smul.u32 2, %s19
      $region36: #{spectral_transform.6} parent=31 // pred_fallthru
        _
    $region32: #{spectral_transform.6} parent=5 // pred_fallthru
      _
    %p255 = scmp.le.s32.totalorder 2, %s9
    // Predicated region
    $region37: #{spectral_transform.6} parent=5 // pred_check
      %p256 = pneg %p255
    $region38: #{spectral_transform.6} parent=5 // pred_check_branch
      %258 = sbr.rel (%p256) target = $region40
    $region39: #{spectral_transform.6} parent=5 // pred_region
      %s259 = ssub.s32 %s9, 2
      // Predicated region
      $region41: #{spectral_transform.6} parent=39 // pred_check
        %p260 = pneg %p122
      $region42: #{spectral_transform.6} parent=39 // pred_check_branch
        %262 = sbr.rel (%p260) target = $region44
      $region43: #{spectral_transform.6} parent=39 // pred_region
        %s263 = smul.u32 2, %s21
        %p264 = scmp.lt.s32.totalorder %s20, 1
        %s265 = scalar_select %p264, %s20, 1
        %p266 = scmp.lt.s32.totalorder %s263, 1
        %s267 = scalar_select %p266, %s263, 1
        %s268 = smul.addr %s265, 2
        %s269 = sadd.s32 %s267, %s268
        %s270 = smul.addr %s269, 4
        %s271 = scalar_lea.vmem %s3, %s270
      $region44: #{spectral_transform.6} parent=39 // pred_fallthru
        _
    $region40: #{spectral_transform.6} parent=5 // pred_fallthru
      _
  $region6: #{spectral_transform.6} parent=0 // loop_footer
    %s13 = sadd.s32 1, %s9
  $region7: #{spectral_transform.6} parent=0 // loop_footer_branch
    %8 = sbr.rel target = $region3
  $region8: #{spectral_transform.6} parent=0 // loop_exit
    _

// kernel: spectral_transform.5
$region0: #{spectral_transform.5}
  #allocation0 [shape = 'u32[]', space=smem, size = 0x4, offset = 0x4, fixed_abs, tag = 'smem constant byte address 0x4 - core index']
  #allocation1 [shape = 'u32[144,128]{1,0:T(1,128)}', space=vmem, size = 0x12000, scoped, tag = 'internal scratch']
  %s0 = inlined_call_operand.vmem [shape: f32[2,4,256], index: 0, kind: input, shape index: {}]
  %s1 = inlined_call_operand.vmem [shape: bf16[4,4], index: 1, kind: input, shape index: {}]
  %s2 = inlined_call_operand.vmem [shape: bf16[2,4,256], index: 2, kind: output, shape index: {0}]
  %s3 = inlined_call_operand.vmem [shape: f32[2,4,2], index: 3, kind: output, shape index: {1}]
  %4 = xla_tuple %s2, %s3
  %s5 = sld [smem:[#allocation0]]
  $region53: #{spectral_transform.5} parent=0
    _
  %s7 = ssub.s32 1, %s5
  %s8 = scalar_select 0, %s7, %s5
  loop: start=0, step=1, limit=4
  $region2: #{spectral_transform.5} parent=0 // loop_pre_header
    _
  $region3: #{spectral_transform.5} parent=0 // loop_header
    %s10 = sphi 0, %s14
    %p11 = scmp.ge.s32.totalorder %s10, 4
    %s17 = sphi 0, %s29
    %s18 = sphi 0, %s25
    %s19 = sphi 0, %s17
    %s20 = sphi 0, %s18
    %s21 = sphi 0, %s19
    %s22 = sphi 0, %s20
    %s34 = sphi 0, %s36
    %s37 = sphi 0, %s34
    %s38 = sphi 0, %s37
    %s54 = sphi 0, %s38
    %s58 = sphi 0, %s58
    %s60 = sphi 0, %s58
    %s61 = sphi 0, %s60
    %s75 = sphi 0, %s61
    %s83 = sphi 0, %s85
    %s86 = sphi 0, %s83
    %s87 = sphi 0, %s86
    %s103 = sphi 0, %s87
    %s109 = sphi 0, %s111
    %s112 = sphi 0, %s109
    %s113 = sphi 0, %s112
    %s129 = sphi 0, %s113
  $region4: #{spectral_transform.5} parent=0 // loop_header_branch
    %13 = sbr.rel (%p11) target = $region8
  $region5: #{spectral_transform.5} parent=0 // loop_body
    %s15 = ssub.s32 %s10, 1
    %s16 = ssub.s32 %s10, 2
    %s23 = sadd.s32 1, %s18
    %p24 = scmp.ge.s32.totalorder %s23, 1
    %s25 = scalar_select %p24, 0, %s23
    %s26 = sadd.s32 1, %s17
    %s27 = scalar_select %p24, %s26, %s17
    %p28 = scmp.ge.s32.totalorder %s27, 2
    %s29 = scalar_select %p28, 0, %s27
    %s30 = ssub.s32 %s17, %s29
    %s31 = ssub.s32 %s18, %s25
    %s32 = sor.u32 %s30, %s31
    %p33 = scmp.eq.s32.totalorder %s32, 0
    %s35 = sadd.s32 %s34, 1
    %s36 = scalar_select %p33, %s34, %s35
    %p39 = pneg %p33
    %p40 = scmp.eq.s32.totalorder %s10, 1
    %p41 = por %p39, %p40
    %p42 = scmp.ne.s32.totalorder %s34, %s37
    %p43 = scmp.eq.s32.totalorder %s10, 0
    %p44 = por %p42, %p43
    %p45 = scmp.ne.s32.totalorder %s34, %s37
    %p46 = scmp.eq.s32.totalorder %s15, 1
    %p47 = por %p45, %p46
    %p48 = scmp.ne.s32.totalorder %s37, %s38
    %p49 = scmp.eq.s32.totalorder %s15, 0
    %p50 = por %p48, %p49
    %p51 = scmp.ne.s32.totalorder %s37, %s38
    %p52 = scmp.eq.s32.totalorder %s16, 1
    %p53 = por %p51, %p52
    %p55 = scmp.ne.s32.totalorder %s38, %s54
    %p56 = scmp.eq.s32.totalorder %s16, 0
    %p57 = por %p55, %p56
    %s59 = sadd.s32 %s58, 1
    %p62 = scmp.eq.s32.totalorder %s10, 1
    %p63 = scmp.ne.s32.totalorder %s58, %s60
    %p64 = scmp.eq.s32.totalorder %s10, 0
    %p65 = por %p63, %p64
    %p66 = scmp.ne.s32.totalorder %s58, %s60
    %p67 = scmp.eq.s32.totalorder %s15, 1
    %p68 = por %p66, %p67
    %p69 = scmp.ne.s32.totalorder %s60, %s61
    %p70 = scmp.eq.s32.totalorder %s15, 0
    %p71 = por %p69, %p70
    %p72 = scmp.ne.s32.totalorder %s60, %s61
    %p73 = scmp.eq.s32.totalorder %s16, 1
    %p74 = por %p72, %p73
    %p76 = scmp.ne.s32.totalorder %s61, %s75
    %p77 = scmp.eq.s32.totalorder %s16, 0
    %p78 = por %p76, %p77
    %s79 = ssub.s32 %s17, %s29
    %s80 = ssub.s32 %s18, %s25
    %s81 = sor.u32 %s79, %s80
    %p82 = scmp.eq.s32.totalorder %s81, 0
    %s84 = sadd.s32 %s83, 1
    %s85 = scalar_select %p82, %s83, %s84
    %p88 = pneg %p82
    %p89 = scmp.eq.s32.totalorder %s10, 1
    %p90 = por %p88, %p89
    %p91 = scmp.ne.s32.totalorder %s83, %s86
    %p92 = scmp.eq.s32.totalorder %s10, 0
    %p93 = por %p91, %p92
    %p94 = scmp.ne.s32.totalorder %s83, %s86
    %p95 = scmp.eq.s32.totalorder %s15, 1
    %p96 = por %p94, %p95
    %p97 = scmp.ne.s32.totalorder %s86, %s87
    %p98 = scmp.eq.s32.totalorder %s15, 0
    %p99 = por %p97, %p98
    %p100 = scmp.ne.s32.totalorder %s86, %s87
    %p101 = scmp.eq.s32.totalorder %s16, 1
    %p102 = por %p100, %p101
    %p104 = scmp.ne.s32.totalorder %s87, %s103
    %p105 = scmp.eq.s32.totalorder %s16, 0
    %p106 = por %p104, %p105
    %s107 = ssub.s32 %s17, %s29
    %p108 = scmp.eq.s32.totalorder %s107, 0
    %s110 = sadd.s32 %s109, 1
    %s111 = scalar_select %p108, %s109, %s110
    %p114 = pneg %p108
    %p115 = scmp.eq.s32.totalorder %s10, 1
    %p116 = por %p114, %p115
    %p117 = scmp.ne.s32.totalorder %s109, %s112
    %p118 = scmp.eq.s32.totalorder %s10, 0
    %p119 = por %p117, %p118
    %p120 = scmp.ne.s32.totalorder %s109, %s112
    %p121 = scmp.eq.s32.totalorder %s15, 1
    %p122 = por %p120, %p121
    %p123 = scmp.ne.s32.totalorder %s112, %s113
    %p124 = scmp.eq.s32.totalorder %s15, 0
    %p125 = por %p123, %p124
    %p126 = scmp.ne.s32.totalorder %s112, %s113
    %p127 = scmp.eq.s32.totalorder %s16, 1
    %p128 = por %p126, %p127
    %p130 = scmp.ne.s32.totalorder %s113, %s129
    %p131 = scmp.eq.s32.totalorder %s16, 0
    %p132 = por %p130, %p131
    %p133 = scmp.le.s32.totalorder 1, %s10
    %p134 = scmp.lt.s32.totalorder %s10, 3
    %p135 = pnand %p133, %p134
    %p136 = pneg %p135
    // Predicated region
    $region9: #{spectral_transform.5} parent=5 // pred_check
      _
    $region10: #{spectral_transform.5} parent=5 // pred_check_branch
      %138 = sbr.rel (%p135) target = $region12
    $region11: #{spectral_transform.5} parent=5 // pred_region
      %s139 = ssub.s32 %s10, 1
      // Predicated region
      $region13: #{spectral_transform.5} parent=11 // pred_check
        %p140 = pneg %p71
      $region14: #{spectral_transform.5} parent=11 // pred_check_branch
        %142 = sbr.rel (%p140) target = $region16
      $region15: #{spectral_transform.5} parent=11 // pred_region
        _
      $region16: #{spectral_transform.5} parent=11 // pred_fallthru
        _
    $region12: #{spectral_transform.5} parent=5 // pred_fallthru
      _
    %p143 = scmp.lt.s32.totalorder %s10, 2
    // Predicated region
    $region17: #{spectral_transform.5} parent=5 // pred_check
      %p144 = pneg %p143
    $region18: #{spectral_transform.5} parent=5 // pred_check_branch
      %146 = sbr.rel (%p144) target = $region20
    $region19: #{spectral_transform.5} parent=5 // pred_region
      // Predicated region
      $region21: #{spectral_transform.5} parent=19 // pred_check
        %p147 = pneg %p44
      $region22: #{spectral_transform.5} parent=19 // pred_check_branch
        %149 = sbr.rel (%p147) target = $region24
      $region23: #{spectral_transform.5} parent=19 // pred_region
        %s150 = smul.u32 2, %s18
        %p151 = scmp.lt.s32.totalorder %s17, 1
        %s152 = scalar_select %p151, %s17, 1
        %p153 = scmp.lt.s32.totalorder %s150, 1
        %s154 = scalar_select %p153, %s150, 1
        %s155 = smul.addr %s152, 2
        %s156 = sadd.s32 %s154, %s155
        %s157 = smul.addr %s156, 4
        %s158 = scalar_lea.vmem %s0, %s157
        %s159 = smul.u32 2, %s18
      $region24: #{spectral_transform.5} parent=19 // pred_fallthru
        _
    $region20: #{spectral_transform.5} parent=5 // pred_fallthru
      _
    %p160 = scmp.le.s32.totalorder 1, %s10
    %p161 = scmp.lt.s32.totalorder %s10, 3
    %p162 = pnand %p160, %p161
    %p163 = pneg %p162
    // Predicated region
    $region25: #{spectral_transform.5} parent=5 // pred_check
      _
    $region26: #{spectral_transform.5} parent=5 // pred_check_branch
      %165 = sbr.rel (%p162) target = $region28
    $region27: #{spectral_transform.5} parent=5 // pred_region
      %s166 = ssub.s32 %s10, 1
      %s167 = smul.u32 2, %s20
      %p168 = scmp.lt.s32.totalorder %s19, 1
      %s169 = scalar_select %p168, %s19, 1
      %p170 = scmp.lt.s32.totalorder %s167, 1
      %s171 = scalar_select %p170, %s167, 1
      %s172 = smul.addr %s169, 2
      %s173 = sadd.s32 %s171, %s172
      %s174 = smul.addr %s173, 4
      %s175 = scalar_lea.vmem %s0, %s174
      %p176 = pneg %p50
      %p177 = pneg %p47
      %p178 = pneg %p71
      %p179 = pneg %p68
      %p180 = pneg %p99
      %p181 = pneg %p96
      %s182 = smul.u32 2, %s20
      %p183 = scmp.lt.s32.totalorder %s19, 1
      %s184 = scalar_select %p183, %s19, 1
      %p185 = scmp.lt.s32.totalorder %s182, 1
      %s186 = scalar_select %p185, %s182, 1
      %s187 = smul.addr %s184, 2
      %s188 = sadd.s32 %s186, %s187
      %s189 = smul.addr %s188, 2
      %s190 = scalar_lea.vmem %s2, %s189
      %p191 = pneg %p125
      %p192 = pneg %p122
      %p193 = scmp.lt.s32.totalorder %s19, 1
      %s194 = scalar_select %p193, %s19, 1
      %s195 = smul.addr %s194, 4
      %s196 = scalar_lea.vmem %s3, %s195
      %s197 = smul.u32 2, %s20
      %p198 = scmp.lt.s32.totalorder %s19, 1
      %s199 = scalar_select %p198, %s19, 1
      %p200 = scmp.lt.s32.totalorder %s197, 1
      %s201 = scalar_select %p200, %s197, 1
      %s202 = smul.addr %s199, 2
      %s203 = sadd.s32 %s201, %s202
      %s204 = smul.addr %s203, 4
      %s205 = scalar_lea.vmem %s0, %s204
      %s206 = smul.u32 2, %s20
      %s207 = smul.u32 2, %s20
      %p208 = scmp.lt.s32.totalorder %s19, 1
      %s209 = scalar_select %p208, %s19, 1
      %p210 = scmp.lt.s32.totalorder %s207, 1
      %s211 = scalar_select %p210, %s207, 1
      %s212 = smul.addr %s209, 2
      %s213 = sadd.s32 %s211, %s212
      %s214 = smul.addr %s213, 2
      %s215 = scalar_lea.vmem %s2, %s214
      %s216 = smul.u32 2, %s20
      %p217 = scmp.lt.s32.totalorder %s19, 1
      %s218 = scalar_select %p217, %s19, 1
      %s219 = smul.addr %s218, 4
      %s220 = scalar_lea.vmem %s3, %s219
      %v222 = vld [vmem:[%s205] sm:$0xff]
      %v224 = vcombine.high %v222, %v222
      %v226 = vpack.c.bf16 %v222, %v222
      %v227 = vpack.c.bf16 %v224, %v224
      %v228 = vld [vmem:[%s1] sm:$0x3]
      %vm229 = vcmask 31744
      %v231 = vsel %vm229, %v228, 0
      %vm233 = vcmask 1041408
      %v235 = vsel %vm233, %v226, 0
      %v238 = vsel %vm233, %v227, 0
      %240 = vmatprep.subr.bf16.mxu0 %v238
      %241 = vmatpush1.bf16.msra.mxu0 %v235
      %242 = vmatprep.subr.bf16.mxu0 0
      %243 = vmatpush1.bf16.msra.mxu0 0
      %244 = vmatprep.subr.bf16.mxu0 0
      %245 = vmatpush1.bf16.msra.mxu0 0
      %246 = vmatprep.subr.bf16.mxu0 0
      %247 = vmatpush1.bf16.msra.mxu0 0
      %248 = vmatprep.subr.bf16.mxu0 0
      %249 = vmatpush1.bf16.msra.mxu0 0
      %250 = vmatprep.subr.bf16.mxu0 0
      %251 = vmatpush1.bf16.msra.mxu0 0
      %252 = vmatprep.subr.bf16.mxu0 0
      %253 = vmatpush1.bf16.msra.mxu0 0
      %254 = vmatprep.subr.bf16.mxu0 0
      %255 = vmatpush1.bf16.msra.mxu0 0
      %256 = vmatprep.subr.bf16.mxu0 0
      %257 = vmatpush1.bf16.msra.mxu0 0
      %258 = vmatprep.subr.bf16.mxu0 0
      %259 = vmatpush1.bf16.msra.mxu0 0
      %260 = vmatprep.subr.bf16.mxu0 0
      %261 = vmatpush1.bf16.msra.mxu0 0
      %262 = vmatprep.subr.bf16.mxu0 0
      %263 = vmatpush1.bf16.msra.mxu0 0
      %264 = vmatprep.subr.bf16.mxu0 0
      %265 = vmatpush1.bf16.msra.mxu0 0
      %266 = vmatprep.subr.bf16.mxu0 0
      %267 = vmatpush1.bf16.msra.mxu0 0
      %268 = vmatprep.subr.bf16.mxu0 0
      %269 = vmatpush1.bf16.msra.mxu0 0
      %270 = vmatprep.subr.bf16.mxu0 0
      %271 = vmatpush1.bf16.msra.mxu0 0
      %272 = vmatprep.mubr.bf16.mxu0 0
      %273 = vmatmul.mubr.bf16.gmra.mrb[0].mxu0 %v231
      %v274 = vpop.f32.mrb[0].mxu0
      %v275 = vadd.f32 0.0, %v274
      %v276 = vpop.f32.mrb[0].mxu0
      %v277 = vadd.f32 0.0, %v276
      %v278 = vpop.f32.mrb[0].mxu0
      %v279 = vpop.f32.mrb[0].mxu0
      %280 = vdwg.mxu0
      %v281 = vpack.c.bf16 %v275, %v275
      %v282 = vpack.c.bf16 %v277, %v277
      %v285 = vcombine.low %v281, %v282
      %v287 = vunpack.c.l.s4 1983009808
      %v288 = vunpack.c.0.s8 %v287
      %v289 = vlaneseq
      %v290 = vshrl.u32 %v289, 7
      %v291 = vsub.s32 %v288, %v290
      %v292 = vrot.slane %v285, %v291
      %294 = vst [vmem:[%s215] sm:$0xf] %v292
      %vm295 = vcmask 1043456
      %v296 = vsel %vm295, %v275, 0.0
      %v297 = vsel %vm295, %v277, 0.0
      %v298 = vadd.f32 %v296, %v297
      %299 = vadd.xlane.f32.xlu0 %v298
      %v300 = vpop.xlane.xlu0 %299
      %v301 = vmul.f32 %v275, %v275
      %v302 = vmul.f32 %v277, %v277
      %v303 = vsel %vm295, %v301, 0.0
      %v304 = vsel %vm295, %v302, 0.0
      %v305 = vadd.f32 %v303, %v304
      %306 = vadd.xlane.f32.xlu0 %v305
      %v307 = vpop.xlane.xlu0 %306
      %v308 = vlaneseq
      %v309 = vand.u32 %v308, 127
      %vm310 = vcmp.eq.s32.totalorder %v309, 0
      %v311 = vsel %vm310, %v300, %v307
      %p312 = scmp.eq.s32.totalorder %s20, 0
      // Predicated region
      $region29: #{spectral_transform.5} parent=27 // pred_check
        %p313 = pneg %p312
      $region30: #{spectral_transform.5} parent=27 // pred_check_branch
        %315 = sbr.rel (%p313) target = $region32
      $region31: #{spectral_transform.5} parent=27 // pred_region
        %vm316 = vcmask 11264
        %317 = vst.msk [vmem:[%s220] sm:$0xf] %vm316, 0.0
      $region32: #{spectral_transform.5} parent=27 // pred_fallthru
        _
      %v318 = vld [vmem:[%s220] sm:$0xf]
      %v319 = vadd.f32 %v318, %v311
      %vm320 = vcmask 11264
      %321 = vst.msk [vmem:[%s220] sm:$0xf] %vm320, %v319
      %s322 = smul.u32 2, %s20
      %p323 = scmp.lt.s32.totalorder %s19, 1
      %s324 = scalar_select %p323, %s19, 1
      %p325 = scmp.lt.s32.totalorder %s322, 1
      %s326 = scalar_select %p325, %s322, 1
      %s327 = smul.addr %s324, 2
      %s328 = sadd.s32 %s326, %s327
      %s329 = smul.addr %s328, 2
      %s330 = scalar_lea.vmem %s2, %s329
      %p331 = scmp.lt.s32.totalorder %s19, 1
      %s332 = scalar_select %p331, %s19, 1
      %s333 = smul.addr %s332, 4
      %s334 = scalar_lea.vmem %s3, %s333
      // Predicated region
      $region33: #{spectral_transform.5} parent=27 // pred_check
        %p335 = pneg %p96
      $region34: #{spectral_transform.5} parent=27 // pred_check_branch
        %337 = sbr.rel (%p335) target = $region36
      $region35: #{spectral_transform.5} parent=27 // pred_region
        %s338 = smul.u32 2, %s20
      $region36: #{spectral_transform.5} parent=27 // pred_fallthru
        _
      // Predicated region
      $region37: #{spectral_transform.5} parent=27 // pred_check
        %p339 = pneg %p122
      $region38: #{spectral_transform.5} parent=27 // pred_check_branch
        %341 = sbr.rel (%p339) target = $region40
      $region39: #{spectral_transform.5} parent=27 // pred_region
        _
      $region40: #{spectral_transform.5} parent=27 // pred_fallthru
        _
    $region28: #{spectral_transform.5} parent=5 // pred_fallthru
      _
    %p342 = scmp.le.s32.totalorder 2, %s10
    // Predicated region
    $region41: #{spectral_transform.5} parent=5 // pred_check
      %p343 = pneg %p342
    $region42: #{spectral_transform.5} parent=5 // pred_check_branch
      %345 = sbr.rel (%p343) target = $region44
    $region43: #{spectral_transform.5} parent=5 // pred_region
      %s346 = ssub.s32 %s10, 2
      // Predicated region
      $region45: #{spectral_transform.5} parent=43 // pred_check
        %p347 = pneg %p102
      $region46: #{spectral_transform.5} parent=43 // pred_check_branch
        %349 = sbr.rel (%p347) target = $region48
      $region47: #{spectral_transform.5} parent=43 // pred_region
        %s350 = smul.u32 2, %s22
        %p351 = scmp.lt.s32.totalorder %s21, 1
        %s352 = scalar_select %p351, %s21, 1
        %p353 = scmp.lt.s32.totalorder %s350, 1
        %s354 = scalar_select %p353, %s350, 1
        %s355 = smul.addr %s352, 2
        %s356 = sadd.s32 %s354, %s355
        %s357 = smul.addr %s356, 2
        %s358 = scalar_lea.vmem %s2, %s357
      $region48: #{spectral_transform.5} parent=43 // pred_fallthru
        _
      // Predicated region
      $region49: #{spectral_transform.5} parent=43 // pred_check
        %p359 = pneg %p128
      $region50: #{spectral_transform.5} parent=43 // pred_check_branch
        %361 = sbr.rel (%p359) target = $region52
      $region51: #{spectral_transform.5} parent=43 // pred_region
        %p362 = scmp.lt.s32.totalorder %s21, 1
        %s363 = scalar_select %p362, %s21, 1
        %s364 = smul.addr %s363, 4
        %s365 = scalar_lea.vmem %s3, %s364
      $region52: #{spectral_transform.5} parent=43 // pred_fallthru
        _
    $region44: #{spectral_transform.5} parent=5 // pred_fallthru
      _
  $region6: #{spectral_transform.5} parent=0 // loop_footer
    %s14 = sadd.s32 1, %s10
  $region7: #{spectral_transform.5} parent=0 // loop_footer_branch
    %9 = sbr.rel target = $region3
  $region8: #{spectral_transform.5} parent=0 // loop_exit
    _

// kernel: spectral_transform.7
$region0: #{spectral_transform.7}
  #allocation0 [shape = 'u32[]', space=smem, size = 0x4, offset = 0x4, fixed_abs, tag = 'smem constant byte address 0x4 - core index']
  #allocation1 [shape = 'u32[144,128]{1,0:T(1,128)}', space=vmem, size = 0x12000, scoped, tag = 'internal scratch']
  %s0 = inlined_call_operand.vmem [shape: bf16[2,4,256], index: 0, kind: input, shape index: {}]
  %s1 = inlined_call_operand.vmem [shape: bf16[2,4,256], index: 1, kind: input, shape index: {}]
  %s2 = inlined_call_operand.vmem [shape: bf16[8,4], index: 2, kind: input, shape index: {}]
  %s3 = inlined_call_operand.vmem [shape: bf16[8,4], index: 3, kind: input, shape index: {}]
  %s4 = inlined_call_operand.vmem [shape: f32[2,8,2], index: 4, kind: output, shape index: {}]
  %s5 = sld [smem:[#allocation0]]
  $region53: #{spectral_transform.7} parent=0
    _
  %s7 = ssub.s32 1, %s5
  %s8 = scalar_select 0, %s7, %s5
  loop: start=0, step=1, limit=4
  $region2: #{spectral_transform.7} parent=0 // loop_pre_header
    _
  $region3: #{spectral_transform.7} parent=0 // loop_header
    %s10 = sphi 0, %s14
    %p11 = scmp.ge.s32.totalorder %s10, 4
    %s17 = sphi 0, %s29
    %s18 = sphi 0, %s25
    %s19 = sphi 0, %s17
    %s20 = sphi 0, %s18
    %s21 = sphi 0, %s19
    %s22 = sphi 0, %s20
    %s34 = sphi 0, %s36
    %s37 = sphi 0, %s34
    %s38 = sphi 0, %s37
    %s54 = sphi 0, %s38
    %s62 = sphi 0, %s64
    %s65 = sphi 0, %s62
    %s66 = sphi 0, %s65
    %s82 = sphi 0, %s66
    %s86 = sphi 0, %s86
    %s88 = sphi 0, %s86
    %s89 = sphi 0, %s88
    %s103 = sphi 0, %s89
    %s107 = sphi 0, %s107
    %s109 = sphi 0, %s107
    %s110 = sphi 0, %s109
    %s124 = sphi 0, %s110
    %s130 = sphi 0, %s132
    %s133 = sphi 0, %s130
    %s134 = sphi 0, %s133
    %s150 = sphi 0, %s134
  $region4: #{spectral_transform.7} parent=0 // loop_header_branch
    %13 = sbr.rel (%p11) target = $region8
  $region5: #{spectral_transform.7} parent=0 // loop_body
    %s15 = ssub.s32 %s10, 1
    %s16 = ssub.s32 %s10, 2
    %s23 = sadd.s32 1, %s18
    %p24 = scmp.ge.s32.totalorder %s23, 1
    %s25 = scalar_select %p24, 0, %s23
    %s26 = sadd.s32 1, %s17
    %s27 = scalar_select %p24, %s26, %s17
    %p28 = scmp.ge.s32.totalorder %s27, 2
    %s29 = scalar_select %p28, 0, %s27
    %s30 = ssub.s32 %s17, %s29
    %s31 = ssub.s32 %s18, %s25
    %s32 = sor.u32 %s30, %s31
    %p33 = scmp.eq.s32.totalorder %s32, 0
    %s35 = sadd.s32 %s34, 1
    %s36 = scalar_select %p33, %s34, %s35
    %p39 = pneg %p33
    %p40 = scmp.eq.s32.totalorder %s10, 1
    %p41 = por %p39, %p40
    %p42 = scmp.ne.s32.totalorder %s34, %s37
    %p43 = scmp.eq.s32.totalorder %s10, 0
    %p44 = por %p42, %p43
    %p45 = scmp.ne.s32.totalorder %s34, %s37
    %p46 = scmp.eq.s32.totalorder %s15, 1
    %p47 = por %p45, %p46
    %p48 = scmp.ne.s32.totalorder %s37, %s38
    %p49 = scmp.eq.s32.totalorder %s15, 0
    %p50 = por %p48, %p49
    %p51 = scmp.ne.s32.totalorder %s37, %s38
    %p52 = scmp.eq.s32.totalorder %s16, 1
    %p53 = por %p51, %p52
    %p55 = scmp.ne.s32.totalorder %s38, %s54
    %p56 = scmp.eq.s32.totalorder %s16, 0
    %p57 = por %p55, %p56
    %s58 = ssub.s32 %s17, %s29
    %s59 = ssub.s32 %s18, %s25
    %s60 = sor.u32 %s58, %s59
    %p61 = scmp.eq.s32.totalorder %s60, 0
    %s63 = sadd.s32 %s62, 1
    %s64 = scalar_select %p61, %s62, %s63
    %p67 = pneg %p61
    %p68 = scmp.eq.s32.totalorder %s10, 1
    %p69 = por %p67, %p68
    %p70 = scmp.ne.s32.totalorder %s62, %s65
    %p71 = scmp.eq.s32.totalorder %s10, 0
    %p72 = por %p70, %p71
    %p73 = scmp.ne.s32.totalorder %s62, %s65
    %p74 = scmp.eq.s32.totalorder %s15, 1
    %p75 = por %p73, %p74
    %p76 = scmp.ne.s32.totalorder %s65, %s66
    %p77 = scmp.eq.s32.totalorder %s15, 0
    %p78 = por %p76, %p77
    %p79 = scmp.ne.s32.totalorder %s65, %s66
    %p80 = scmp.eq.s32.totalorder %s16, 1
    %p81 = por %p79, %p80
    %p83 = scmp.ne.s32.totalorder %s66, %s82
    %p84 = scmp.eq.s32.totalorder %s16, 0
    %p85 = por %p83, %p84
    %s87 = sadd.s32 %s86, 1
    %p90 = scmp.eq.s32.totalorder %s10, 1
    %p91 = scmp.ne.s32.totalorder %s86, %s88
    %p92 = scmp.eq.s32.totalorder %s10, 0
    %p93 = por %p91, %p92
    %p94 = scmp.ne.s32.totalorder %s86, %s88
    %p95 = scmp.eq.s32.totalorder %s15, 1
    %p96 = por %p94, %p95
    %p97 = scmp.ne.s32.totalorder %s88, %s89
    %p98 = scmp.eq.s32.totalorder %s15, 0
    %p99 = por %p97, %p98
    %p100 = scmp.ne.s32.totalorder %s88, %s89
    %p101 = scmp.eq.s32.totalorder %s16, 1
    %p102 = por %p100, %p101
    %p104 = scmp.ne.s32.totalorder %s89, %s103
    %p105 = scmp.eq.s32.totalorder %s16, 0
    %p106 = por %p104, %p105
    %s108 = sadd.s32 %s107, 1
    %p111 = scmp.eq.s32.totalorder %s10, 1
    %p112 = scmp.ne.s32.totalorder %s107, %s109
    %p113 = scmp.eq.s32.totalorder %s10, 0
    %p114 = por %p112, %p113
    %p115 = scmp.ne.s32.totalorder %s107, %s109
    %p116 = scmp.eq.s32.totalorder %s15, 1
    %p117 = por %p115, %p116
    %p118 = scmp.ne.s32.totalorder %s109, %s110
    %p119 = scmp.eq.s32.totalorder %s15, 0
    %p120 = por %p118, %p119
    %p121 = scmp.ne.s32.totalorder %s109, %s110
    %p122 = scmp.eq.s32.totalorder %s16, 1
    %p123 = por %p121, %p122
    %p125 = scmp.ne.s32.totalorder %s110, %s124
    %p126 = scmp.eq.s32.totalorder %s16, 0
    %p127 = por %p125, %p126
    %s128 = ssub.s32 %s17, %s29
    %p129 = scmp.eq.s32.totalorder %s128, 0
    %s131 = sadd.s32 %s130, 1
    %s132 = scalar_select %p129, %s130, %s131
    %p135 = pneg %p129
    %p136 = scmp.eq.s32.totalorder %s10, 1
    %p137 = por %p135, %p136
    %p138 = scmp.ne.s32.totalorder %s130, %s133
    %p139 = scmp.eq.s32.totalorder %s10, 0
    %p140 = por %p138, %p139
    %p141 = scmp.ne.s32.totalorder %s130, %s133
    %p142 = scmp.eq.s32.totalorder %s15, 1
    %p143 = por %p141, %p142
    %p144 = scmp.ne.s32.totalorder %s133, %s134
    %p145 = scmp.eq.s32.totalorder %s15, 0
    %p146 = por %p144, %p145
    %p147 = scmp.ne.s32.totalorder %s133, %s134
    %p148 = scmp.eq.s32.totalorder %s16, 1
    %p149 = por %p147, %p148
    %p151 = scmp.ne.s32.totalorder %s134, %s150
    %p152 = scmp.eq.s32.totalorder %s16, 0
    %p153 = por %p151, %p152
    %p154 = scmp.le.s32.totalorder 1, %s10
    %p155 = scmp.lt.s32.totalorder %s10, 3
    %p156 = pnand %p154, %p155
    %p157 = pneg %p156
    // Predicated region
    $region9: #{spectral_transform.7} parent=5 // pred_check
      _
    $region10: #{spectral_transform.7} parent=5 // pred_check_branch
      %159 = sbr.rel (%p156) target = $region12
    $region11: #{spectral_transform.7} parent=5 // pred_region
      %s160 = ssub.s32 %s10, 1
      // Predicated region
      $region13: #{spectral_transform.7} parent=11 // pred_check
        %p161 = pneg %p99
      $region14: #{spectral_transform.7} parent=11 // pred_check_branch
        %163 = sbr.rel (%p161) target = $region16
      $region15: #{spectral_transform.7} parent=11 // pred_region
        _
      $region16: #{spectral_transform.7} parent=11 // pred_fallthru
        _
      // Predicated region
      $region17: #{spectral_transform.7} parent=11 // pred_check
        %p164 = pneg %p120
      $region18: #{spectral_transform.7} parent=11 // pred_check_branch
        %166 = sbr.rel (%p164) target = $region20
      $region19: #{spectral_transform.7} parent=11 // pred_region
        _
      $region20: #{spectral_transform.7} parent=11 // pred_fallthru
        _
    $region12: #{spectral_transform.7} parent=5 // pred_fallthru
      _
    %p167 = scmp.lt.s32.totalorder %s10, 2
    // Predicated region
    $region21: #{spectral_transform.7} parent=5 // pred_check
      %p168 = pneg %p167
    $region22: #{spectral_transform.7} parent=5 // pred_check_branch
      %170 = sbr.rel (%p168) target = $region24
    $region23: #{spectral_transform.7} parent=5 // pred_region
      // Predicated region
      $region25: #{spectral_transform.7} parent=23 // pred_check
        %p171 = pneg %p44
      $region26: #{spectral_transform.7} parent=23 // pred_check_branch
        %173 = sbr.rel (%p171) target = $region28
      $region27: #{spectral_transform.7} parent=23 // pred_region
        %s174 = smul.u32 2, %s18
        %p175 = scmp.lt.s32.totalorder %s17, 1
        %s176 = scalar_select %p175, %s17, 1
        %p177 = scmp.lt.s32.totalorder %s174, 1
        %s178 = scalar_select %p177, %s174, 1
        %s179 = smul.addr %s176, 2
        %s180 = sadd.s32 %s178, %s179
        %s181 = smul.addr %s180, 2
        %s182 = scalar_lea.vmem %s0, %s181
        %s183 = smul.u32 2, %s18
      $region28: #{spectral_transform.7} parent=23 // pred_fallthru
        _
      // Predicated region
      $region29: #{spectral_transform.7} parent=23 // pred_check
        %p184 = pneg %p72
      $region30: #{spectral_transform.7} parent=23 // pred_check_branch
        %186 = sbr.rel (%p184) target = $region32
      $region31: #{spectral_transform.7} parent=23 // pred_region
        %s187 = smul.u32 2, %s18
        %p188 = scmp.lt.s32.totalorder %s17, 1
        %s189 = scalar_select %p188, %s17, 1
        %p190 = scmp.lt.s32.totalorder %s187, 1
        %s191 = scalar_select %p190, %s187, 1
        %s192 = smul.addr %s189, 2
        %s193 = sadd.s32 %s191, %s192
        %s194 = smul.addr %s193, 2
        %s195 = scalar_lea.vmem %s1, %s194
        %s196 = smul.u32 2, %s18
      $region32: #{spectral_transform.7} parent=23 // pred_fallthru
        _
    $region24: #{spectral_transform.7} parent=5 // pred_fallthru
      _
    %p197 = scmp.le.s32.totalorder 1, %s10
    %p198 = scmp.lt.s32.totalorder %s10, 3
    %p199 = pnand %p197, %p198
    %p200 = pneg %p199
    // Predicated region
    $region33: #{spectral_transform.7} parent=5 // pred_check
      _
    $region34: #{spectral_transform.7} parent=5 // pred_check_branch
      %202 = sbr.rel (%p199) target = $region36
    $region35: #{spectral_transform.7} parent=5 // pred_region
      %s203 = ssub.s32 %s10, 1
      %s204 = smul.u32 2, %s20
      %p205 = scmp.lt.s32.totalorder %s19, 1
      %s206 = scalar_select %p205, %s19, 1
      %p207 = scmp.lt.s32.totalorder %s204, 1
      %s208 = scalar_select %p207, %s204, 1
      %s209 = smul.addr %s206, 2
      %s210 = sadd.s32 %s208, %s209
      %s211 = smul.addr %s210, 2
      %s212 = scalar_lea.vmem %s0, %s211
      %p213 = pneg %p50
      %p214 = pneg %p47
      %s215 = smul.u32 2, %s20
      %p216 = scmp.lt.s32.totalorder %s19, 1
      %s217 = scalar_select %p216, %s19, 1
      %p218 = scmp.lt.s32.totalorder %s215, 1
      %s219 = scalar_select %p218, %s215, 1
      %s220 = smul.addr %s217, 2
      %s221 = sadd.s32 %s219, %s220
      %s222 = smul.addr %s221, 2
      %s223 = scalar_lea.vmem %s1, %s222
      %p224 = pneg %p78
      %p225 = pneg %p75
      %p226 = pneg %p99
      %p227 = pneg %p96
      %p228 = pneg %p120
      %p229 = pneg %p117
      %p230 = pneg %p146
      %p231 = pneg %p143
      %p232 = scmp.lt.s32.totalorder %s19, 1
      %s233 = scalar_select %p232, %s19, 1
      %s234 = smul.addr %s233, 8
      %s235 = scalar_lea.vmem %s4, %s234
      %s236 = smul.u32 2, %s20
      %p237 = scmp.lt.s32.totalorder %s19, 1
      %s238 = scalar_select %p237, %s19, 1
      %p239 = scmp.lt.s32.totalorder %s236, 1
      %s240 = scalar_select %p239, %s236, 1
      %s241 = smul.addr %s238, 2
      %s242 = sadd.s32 %s240, %s241
      %s243 = smul.addr %s242, 2
      %s244 = scalar_lea.vmem %s0, %s243
      %s245 = smul.u32 2, %s20
      %s246 = smul.u32 2, %s20
      %p247 = scmp.lt.s32.totalorder %s19, 1
      %s248 = scalar_select %p247, %s19, 1
      %p249 = scmp.lt.s32.totalorder %s246, 1
      %s250 = scalar_select %p249, %s246, 1
      %s251 = smul.addr %s248, 2
      %s252 = sadd.s32 %s250, %s251
      %s253 = smul.addr %s252, 2
      %s254 = scalar_lea.vmem %s1, %s253
      %s255 = smul.u32 2, %s20
      %p256 = scmp.lt.s32.totalorder %s19, 1
      %s257 = scalar_select %p256, %s19, 1
      %s258 = smul.addr %s257, 8
      %s259 = scalar_lea.vmem %s4, %s258
      %v261 = vld [vmem:[%s2] sm:$0xf]
      %v262 = vld [vmem:[%s244] sm:$0xf]
      %v263 = vld [vmem:[%s3] sm:$0xf]
      %v264 = vld [vmem:[%s254] sm:$0xf]
      %v267 = vunpack.c.l.s4 1983009808
      %v268 = vunpack.c.0.s8 %v267
      %v269 = vlaneseq
      %v270 = vshrl.u32 %v269, 7
      %v271 = vsub.s32 %v268, %v270
      %v272 = vrot.slane %v264, %v271
      %v273 = vcombine.high %v272, %v272
      %vm274 = vcmask 31744
      %v276 = vsel %vm274, %v263, 0
      %vm278 = vcmask 1041408
      %v280 = vsel %vm278, %v272, 0
      %v283 = vsel %vm278, %v273, 0
      %285 = vmatprep.subr.bf16.mxu0 %v283
      %286 = vmatpush1.bf16.msra.mxu0 %v280
      %287 = vmatprep.subr.bf16.mxu0 0
      %288 = vmatpush1.bf16.msra.mxu0 0
      %289 = vmatprep.subr.bf16.mxu0 0
      %290 = vmatpush1.bf16.msra.mxu0 0
      %291 = vmatprep.subr.bf16.mxu0 0
      %292 = vmatpush1.bf16.msra.mxu0 0
      %293 = vmatprep.subr.bf16.mxu0 0
      %294 = vmatpush1.bf16.msra.mxu0 0
      %295 = vmatprep.subr.bf16.mxu0 0
      %296 = vmatpush1.bf16.msra.mxu0 0
      %297 = vmatprep.subr.bf16.mxu0 0
      %298 = vmatpush1.bf16.msra.mxu0 0
      %299 = vmatprep.subr.bf16.mxu0 0
      %300 = vmatpush1.bf16.msra.mxu0 0
      %301 = vmatprep.subr.bf16.mxu0 0
      %302 = vmatpush1.bf16.msra.mxu0 0
      %303 = vmatprep.subr.bf16.mxu0 0
      %304 = vmatpush1.bf16.msra.mxu0 0
      %305 = vmatprep.subr.bf16.mxu0 0
      %306 = vmatpush1.bf16.msra.mxu0 0
      %307 = vmatprep.subr.bf16.mxu0 0
      %308 = vmatpush1.bf16.msra.mxu0 0
      %309 = vmatprep.subr.bf16.mxu0 0
      %310 = vmatpush1.bf16.msra.mxu0 0
      %311 = vmatprep.subr.bf16.mxu0 0
      %312 = vmatpush1.bf16.msra.mxu0 0
      %313 = vmatprep.subr.bf16.mxu0 0
      %314 = vmatpush1.bf16.msra.mxu0 0
      %315 = vmatprep.subr.bf16.mxu0 0
      %316 = vmatpush1.bf16.msra.mxu0 0
      %317 = vmatprep.mubr.bf16.mxu0 0
      %318 = vmatmul.mubr.bf16.gmra.mrb[0].mxu0 %v276
      %v319 = vpop.f32.mrb[0].mxu0
      %v320 = vadd.f32 0.0, %v319
      %v321 = vpop.f32.mrb[0].mxu0
      %v322 = vadd.f32 0.0, %v321
      %v323 = vpop.f32.mrb[0].mxu0
      %v324 = vpop.f32.mrb[0].mxu0
      %325 = vdwg.mxu0
      %v328 = vunpack.c.l.s4 1983009808
      %v329 = vunpack.c.0.s8 %v328
      %v330 = vlaneseq
      %v331 = vshrl.u32 %v330, 7
      %v332 = vsub.s32 %v329, %v331
      %v333 = vrot.slane %v262, %v332
      %v334 = vcombine.high %v333, %v333
      %v336 = vsel %vm274, %v261, 0
      %v339 = vsel %vm278, %v333, 0
      %v342 = vsel %vm278, %v334, 0
      %344 = vmatprep.subr.bf16.mxu0 %v342
      %345 = vmatpush1.bf16.msra.mxu0 %v339
      %346 = vmatprep.subr.bf16.mxu0 0
      %347 = vmatpush1.bf16.msra.mxu0 0
      %348 = vmatprep.subr.bf16.mxu0 0
      %349 = vmatpush1.bf16.msra.mxu0 0
      %350 = vmatprep.subr.bf16.mxu0 0
      %351 = vmatpush1.bf16.msra.mxu0 0
      %352 = vmatprep.subr.bf16.mxu0 0
      %353 = vmatpush1.bf16.msra.mxu0 0
      %354 = vmatprep.subr.bf16.mxu0 0
      %355 = vmatpush1.bf16.msra.mxu0 0
      %356 = vmatprep.subr.bf16.mxu0 0
      %357 = vmatpush1.bf16.msra.mxu0 0
      %358 = vmatprep.subr.bf16.mxu0 0
      %359 = vmatpush1.bf16.msra.mxu0 0
      %360 = vmatprep.subr.bf16.mxu0 0
      %361 = vmatpush1.bf16.msra.mxu0 0
      %362 = vmatprep.subr.bf16.mxu0 0
      %363 = vmatpush1.bf16.msra.mxu0 0
      %364 = vmatprep.subr.bf16.mxu0 0
      %365 = vmatpush1.bf16.msra.mxu0 0
      %366 = vmatprep.subr.bf16.mxu0 0
      %367 = vmatpush1.bf16.msra.mxu0 0
      %368 = vmatprep.subr.bf16.mxu0 0
      %369 = vmatpush1.bf16.msra.mxu0 0
      %370 = vmatprep.subr.bf16.mxu0 0
      %371 = vmatpush1.bf16.msra.mxu0 0
      %372 = vmatprep.subr.bf16.mxu0 0
      %373 = vmatpush1.bf16.msra.mxu0 0
      %374 = vmatprep.subr.bf16.mxu0 0
      %375 = vmatpush1.bf16.msra.mxu0 0
      %376 = vmatprep.mubr.bf16.mxu0 0
      %377 = vmatmul.mubr.bf16.gmra.mrb[0].mxu0 %v336
      %v378 = vpop.f32.mrb[0].mxu0
      %v379 = vadd.f32 %v320, %v378
      %v380 = vpop.f32.mrb[0].mxu0
      %v381 = vadd.f32 %v322, %v380
      %v382 = vpop.f32.mrb[0].mxu0
      %v383 = vpop.f32.mrb[0].mxu0
      %384 = vdwg.mxu0
      %v385 = vadd.f32 %v379, %v381
      %386 = vadd.xlane.f32.xlu0 %v385
      %v387 = vpop.xlane.xlu0 %386
      %v388 = vmul.f32 %v379, %v379
      %v389 = vmul.f32 %v381, %v381
      %v390 = vadd.f32 %v388, %v389
      %391 = vadd.xlane.f32.xlu0 %v390
      %v392 = vpop.xlane.xlu0 %391
      %v393 = vlaneseq
      %v394 = vand.u32 %v393, 127
      %vm395 = vcmp.eq.s32.totalorder %v394, 0
      %v396 = vsel %vm395, %v387, %v392
      %p397 = scmp.eq.s32.totalorder %s20, 0
      // Predicated region
      $region37: #{spectral_transform.7} parent=35 // pred_check
        %p398 = pneg %p397
      $region38: #{spectral_transform.7} parent=35 // pred_check_branch
        %400 = sbr.rel (%p398) target = $region40
      $region39: #{spectral_transform.7} parent=35 // pred_region
        %vm401 = vcmask 15360
        %402 = vst.msk [vmem:[%s259] sm:$0xff] %vm401, 0.0
      $region40: #{spectral_transform.7} parent=35 // pred_fallthru
        _
      %v403 = vld [vmem:[%s259] sm:$0xff]
      %v404 = vadd.f32 %v403, %v396
      %vm405 = vcmask 15360
      %406 = vst.msk [vmem:[%s259] sm:$0xff] %vm405, %v404
      %p407 = scmp.lt.s32.totalorder %s19, 1
      %s408 = scalar_select %p407, %s19, 1
      %s409 = smul.addr %s408, 8
      %s410 = scalar_lea.vmem %s4, %s409
      // Predicated region
      $region41: #{spectral_transform.7} parent=35 // pred_check
        %p411 = pneg %p143
      $region42: #{spectral_transform.7} parent=35 // pred_check_branch
        %413 = sbr.rel (%p411) target = $region44
      $region43: #{spectral_transform.7} parent=35 // pred_region
        _
      $region44: #{spectral_transform.7} parent=35 // pred_fallthru
        _
    $region36: #{spectral_transform.7} parent=5 // pred_fallthru
      _
    %p414 = scmp.le.s32.totalorder 2, %s10
    // Predicated region
    $region45: #{spectral_transform.7} parent=5 // pred_check
      %p415 = pneg %p414
    $region46: #{spectral_transform.7} parent=5 // pred_check_branch
      %417 = sbr.rel (%p415) target = $region48
    $region47: #{spectral_transform.7} parent=5 // pred_region
      %s418 = ssub.s32 %s10, 2
      // Predicated region
      $region49: #{spectral_transform.7} parent=47 // pred_check
        %p419 = pneg %p149
      $region50: #{spectral_transform.7} parent=47 // pred_check_branch
        %421 = sbr.rel (%p419) target = $region52
      $region51: #{spectral_transform.7} parent=47 // pred_region
        %p422 = scmp.lt.s32.totalorder %s21, 1
        %s423 = scalar_select %p422, %s21, 1
        %s424 = smul.addr %s423, 8
        %s425 = scalar_lea.vmem %s4, %s424
      $region52: #{spectral_transform.7} parent=47 // pred_fallthru
        _
    $region48: #{spectral_transform.7} parent=5 // pred_fallthru
      _
  $region6: #{spectral_transform.7} parent=0 // loop_footer
    %s14 = sadd.s32 1, %s10
  $region7: #{spectral_transform.7} parent=0 // loop_footer_branch
    %9 = sbr.rel target = $region3
  $region8: #{spectral_transform.7} parent=0 // loop_exit
    _

// kernel: spectral_transform.8
$region0: #{spectral_transform.8}
  #allocation0 [shape = 'u32[]', space=smem, size = 0x4, offset = 0x4, fixed_abs, tag = 'smem constant byte address 0x4 - core index']
  #allocation1 [shape = 'u32[144,128]{1,0:T(1,128)}', space=vmem, size = 0x12000, scoped, tag = 'internal scratch']
  %s0 = inlined_call_operand.vmem [shape: bf16[2,4,256], index: 0, kind: input, shape index: {}]
  %s1 = inlined_call_operand.vmem [shape: bf16[2,4,256], index: 1, kind: input, shape index: {}]
  %s2 = inlined_call_operand.vmem [shape: bf16[8,4], index: 2, kind: input, shape index: {}]
  %s3 = inlined_call_operand.vmem [shape: bf16[8,4], index: 3, kind: input, shape index: {}]
  %s4 = inlined_call_operand.vmem [shape: f32[8,1], index: 4, kind: input, shape index: {}]
  %s5 = inlined_call_operand.vmem [shape: f32[8,1], index: 5, kind: input, shape index: {}]
  %s6 = inlined_call_operand.vmem [shape: bf16[2,4,256], index: 6, kind: output, shape index: {0}]
  %s7 = inlined_call_operand.vmem [shape: bf16[2,4,256], index: 7, kind: output, shape index: {1}]
  %8 = xla_tuple %s6, %s7
  %s9 = sld [smem:[#allocation0]]
  $region65: #{spectral_transform.8} parent=0
    _
  %s11 = ssub.s32 1, %s9
  %s12 = scalar_select 0, %s11, %s9
  loop: start=0, step=1, limit=4
  $region2: #{spectral_transform.8} parent=0 // loop_pre_header
    _
  $region3: #{spectral_transform.8} parent=0 // loop_header
    %s14 = sphi 0, %s18
    %p15 = scmp.ge.s32.totalorder %s14, 4
    %s21 = sphi 0, %s33
    %s22 = sphi 0, %s29
    %s23 = sphi 0, %s21
    %s24 = sphi 0, %s22
    %s25 = sphi 0, %s23
    %s26 = sphi 0, %s24
    %s38 = sphi 0, %s40
    %s41 = sphi 0, %s38
    %s42 = sphi 0, %s41
    %s58 = sphi 0, %s42
    %s66 = sphi 0, %s68
    %s69 = sphi 0, %s66
    %s70 = sphi 0, %s69
    %s86 = sphi 0, %s70
    %s90 = sphi 0, %s90
    %s92 = sphi 0, %s90
    %s93 = sphi 0, %s92
    %s107 = sphi 0, %s93
    %s111 = sphi 0, %s111
    %s113 = sphi 0, %s111
    %s114 = sphi 0, %s113
    %s128 = sphi 0, %s114
    %s132 = sphi 0, %s132
    %s134 = sphi 0, %s132
    %s135 = sphi 0, %s134
    %s149 = sphi 0, %s135
    %s153 = sphi 0, %s153
    %s155 = sphi 0, %s153
    %s156 = sphi 0, %s155
    %s170 = sphi 0, %s156
    %s178 = sphi 0, %s180
    %s181 = sphi 0, %s178
    %s182 = sphi 0, %s181
    %s198 = sphi 0, %s182
    %s206 = sphi 0, %s208
    %s209 = sphi 0, %s206
    %s210 = sphi 0, %s209
    %s226 = sphi 0, %s210
  $region4: #{spectral_transform.8} parent=0 // loop_header_branch
    %17 = sbr.rel (%p15) target = $region8
  $region5: #{spectral_transform.8} parent=0 // loop_body
    %s19 = ssub.s32 %s14, 1
    %s20 = ssub.s32 %s14, 2
    %s27 = sadd.s32 1, %s22
    %p28 = scmp.ge.s32.totalorder %s27, 1
    %s29 = scalar_select %p28, 0, %s27
    %s30 = sadd.s32 1, %s21
    %s31 = scalar_select %p28, %s30, %s21
    %p32 = scmp.ge.s32.totalorder %s31, 2
    %s33 = scalar_select %p32, 0, %s31
    %s34 = ssub.s32 %s21, %s33
    %s35 = ssub.s32 %s22, %s29
    %s36 = sor.u32 %s34, %s35
    %p37 = scmp.eq.s32.totalorder %s36, 0
    %s39 = sadd.s32 %s38, 1
    %s40 = scalar_select %p37, %s38, %s39
    %p43 = pneg %p37
    %p44 = scmp.eq.s32.totalorder %s14, 1
    %p45 = por %p43, %p44
    %p46 = scmp.ne.s32.totalorder %s38, %s41
    %p47 = scmp.eq.s32.totalorder %s14, 0
    %p48 = por %p46, %p47
    %p49 = scmp.ne.s32.totalorder %s38, %s41
    %p50 = scmp.eq.s32.totalorder %s19, 1
    %p51 = por %p49, %p50
    %p52 = scmp.ne.s32.totalorder %s41, %s42
    %p53 = scmp.eq.s32.totalorder %s19, 0
    %p54 = por %p52, %p53
    %p55 = scmp.ne.s32.totalorder %s41, %s42
    %p56 = scmp.eq.s32.totalorder %s20, 1
    %p57 = por %p55, %p56
    %p59 = scmp.ne.s32.totalorder %s42, %s58
    %p60 = scmp.eq.s32.totalorder %s20, 0
    %p61 = por %p59, %p60
    %s62 = ssub.s32 %s21, %s33
    %s63 = ssub.s32 %s22, %s29
    %s64 = sor.u32 %s62, %s63
    %p65 = scmp.eq.s32.totalorder %s64, 0
    %s67 = sadd.s32 %s66, 1
    %s68 = scalar_select %p65, %s66, %s67
    %p71 = pneg %p65
    %p72 = scmp.eq.s32.totalorder %s14, 1
    %p73 = por %p71, %p72
    %p74 = scmp.ne.s32.totalorder %s66, %s69
    %p75 = scmp.eq.s32.totalorder %s14, 0
    %p76 = por %p74, %p75
    %p77 = scmp.ne.s32.totalorder %s66, %s69
    %p78 = scmp.eq.s32.totalorder %s19, 1
    %p79 = por %p77, %p78
    %p80 = scmp.ne.s32.totalorder %s69, %s70
    %p81 = scmp.eq.s32.totalorder %s19, 0
    %p82 = por %p80, %p81
    %p83 = scmp.ne.s32.totalorder %s69, %s70
    %p84 = scmp.eq.s32.totalorder %s20, 1
    %p85 = por %p83, %p84
    %p87 = scmp.ne.s32.totalorder %s70, %s86
    %p88 = scmp.eq.s32.totalorder %s20, 0
    %p89 = por %p87, %p88
    %s91 = sadd.s32 %s90, 1
    %p94 = scmp.eq.s32.totalorder %s14, 1
    %p95 = scmp.ne.s32.totalorder %s90, %s92
    %p96 = scmp.eq.s32.totalorder %s14, 0
    %p97 = por %p95, %p96
    %p98 = scmp.ne.s32.totalorder %s90, %s92
    %p99 = scmp.eq.s32.totalorder %s19, 1
    %p100 = por %p98, %p99
    %p101 = scmp.ne.s32.totalorder %s92, %s93
    %p102 = scmp.eq.s32.totalorder %s19, 0
    %p103 = por %p101, %p102
    %p104 = scmp.ne.s32.totalorder %s92, %s93
    %p105 = scmp.eq.s32.totalorder %s20, 1
    %p106 = por %p104, %p105
    %p108 = scmp.ne.s32.totalorder %s93, %s107
    %p109 = scmp.eq.s32.totalorder %s20, 0
    %p110 = por %p108, %p109
    %s112 = sadd.s32 %s111, 1
    %p115 = scmp.eq.s32.totalorder %s14, 1
    %p116 = scmp.ne.s32.totalorder %s111, %s113
    %p117 = scmp.eq.s32.totalorder %s14, 0
    %p118 = por %p116, %p117
    %p119 = scmp.ne.s32.totalorder %s111, %s113
    %p120 = scmp.eq.s32.totalorder %s19, 1
    %p121 = por %p119, %p120
    %p122 = scmp.ne.s32.totalorder %s113, %s114
    %p123 = scmp.eq.s32.totalorder %s19, 0
    %p124 = por %p122, %p123
    %p125 = scmp.ne.s32.totalorder %s113, %s114
    %p126 = scmp.eq.s32.totalorder %s20, 1
    %p127 = por %p125, %p126
    %p129 = scmp.ne.s32.totalorder %s114, %s128
    %p130 = scmp.eq.s32.totalorder %s20, 0
    %p131 = por %p129, %p130
    %s133 = sadd.s32 %s132, 1
    %p136 = scmp.eq.s32.totalorder %s14, 1
    %p137 = scmp.ne.s32.totalorder %s132, %s134
    %p138 = scmp.eq.s32.totalorder %s14, 0
    %p139 = por %p137, %p138
    %p140 = scmp.ne.s32.totalorder %s132, %s134
    %p141 = scmp.eq.s32.totalorder %s19, 1
    %p142 = por %p140, %p141
    %p143 = scmp.ne.s32.totalorder %s134, %s135
    %p144 = scmp.eq.s32.totalorder %s19, 0
    %p145 = por %p143, %p144
    %p146 = scmp.ne.s32.totalorder %s134, %s135
    %p147 = scmp.eq.s32.totalorder %s20, 1
    %p148 = por %p146, %p147
    %p150 = scmp.ne.s32.totalorder %s135, %s149
    %p151 = scmp.eq.s32.totalorder %s20, 0
    %p152 = por %p150, %p151
    %s154 = sadd.s32 %s153, 1
    %p157 = scmp.eq.s32.totalorder %s14, 1
    %p158 = scmp.ne.s32.totalorder %s153, %s155
    %p159 = scmp.eq.s32.totalorder %s14, 0
    %p160 = por %p158, %p159
    %p161 = scmp.ne.s32.totalorder %s153, %s155
    %p162 = scmp.eq.s32.totalorder %s19, 1
    %p163 = por %p161, %p162
    %p164 = scmp.ne.s32.totalorder %s155, %s156
    %p165 = scmp.eq.s32.totalorder %s19, 0
    %p166 = por %p164, %p165
    %p167 = scmp.ne.s32.totalorder %s155, %s156
    %p168 = scmp.eq.s32.totalorder %s20, 1
    %p169 = por %p167, %p168
    %p171 = scmp.ne.s32.totalorder %s156, %s170
    %p172 = scmp.eq.s32.totalorder %s20, 0
    %p173 = por %p171, %p172
    %s174 = ssub.s32 %s21, %s33
    %s175 = ssub.s32 %s22, %s29
    %s176 = sor.u32 %s174, %s175
    %p177 = scmp.eq.s32.totalorder %s176, 0
    %s179 = sadd.s32 %s178, 1
    %s180 = scalar_select %p177, %s178, %s179
    %p183 = pneg %p177
    %p184 = scmp.eq.s32.totalorder %s14, 1
    %p185 = por %p183, %p184
    %p186 = scmp.ne.s32.totalorder %s178, %s181
    %p187 = scmp.eq.s32.totalorder %s14, 0
    %p188 = por %p186, %p187
    %p189 = scmp.ne.s32.totalorder %s178, %s181
    %p190 = scmp.eq.s32.totalorder %s19, 1
    %p191 = por %p189, %p190
    %p192 = scmp.ne.s32.totalorder %s181, %s182
    %p193 = scmp.eq.s32.totalorder %s19, 0
    %p194 = por %p192, %p193
    %p195 = scmp.ne.s32.totalorder %s181, %s182
    %p196 = scmp.eq.s32.totalorder %s20, 1
    %p197 = por %p195, %p196
    %p199 = scmp.ne.s32.totalorder %s182, %s198
    %p200 = scmp.eq.s32.totalorder %s20, 0
    %p201 = por %p199, %p200
    %s202 = ssub.s32 %s21, %s33
    %s203 = ssub.s32 %s22, %s29
    %s204 = sor.u32 %s202, %s203
    %p205 = scmp.eq.s32.totalorder %s204, 0
    %s207 = sadd.s32 %s206, 1
    %s208 = scalar_select %p205, %s206, %s207
    %p211 = pneg %p205
    %p212 = scmp.eq.s32.totalorder %s14, 1
    %p213 = por %p211, %p212
    %p214 = scmp.ne.s32.totalorder %s206, %s209
    %p215 = scmp.eq.s32.totalorder %s14, 0
    %p216 = por %p214, %p215
    %p217 = scmp.ne.s32.totalorder %s206, %s209
    %p218 = scmp.eq.s32.totalorder %s19, 1
    %p219 = por %p217, %p218
    %p220 = scmp.ne.s32.totalorder %s209, %s210
    %p221 = scmp.eq.s32.totalorder %s19, 0
    %p222 = por %p220, %p221
    %p223 = scmp.ne.s32.totalorder %s209, %s210
    %p224 = scmp.eq.s32.totalorder %s20, 1
    %p225 = por %p223, %p224
    %p227 = scmp.ne.s32.totalorder %s210, %s226
    %p228 = scmp.eq.s32.totalorder %s20, 0
    %p229 = por %p227, %p228
    %p230 = scmp.le.s32.totalorder 1, %s14
    %p231 = scmp.lt.s32.totalorder %s14, 3
    %p232 = pnand %p230, %p231
    %p233 = pneg %p232
    // Predicated region
    $region9: #{spectral_transform.8} parent=5 // pred_check
      _
    $region10: #{spectral_transform.8} parent=5 // pred_check_branch
      %235 = sbr.rel (%p232) target = $region12
    $region11: #{spectral_transform.8} parent=5 // pred_region
      %s236 = ssub.s32 %s14, 1
      // Predicated region
      $region13: #{spectral_transform.8} parent=11 // pred_check
        %p237 = pneg %p103
      $region14: #{spectral_transform.8} parent=11 // pred_check_branch
        %239 = sbr.rel (%p237) target = $region16
      $region15: #{spectral_transform.8} parent=11 // pred_region
        _
      $region16: #{spectral_transform.8} parent=11 // pred_fallthru
        _
      // Predicated region
      $region17: #{spectral_transform.8} parent=11 // pred_check
        %p240 = pneg %p124
      $region18: #{spectral_transform.8} parent=11 // pred_check_branch
        %242 = sbr.rel (%p240) target = $region20
      $region19: #{spectral_transform.8} parent=11 // pred_region
        _
      $region20: #{spectral_transform.8} parent=11 // pred_fallthru
        _
      // Predicated region
      $region21: #{spectral_transform.8} parent=11 // pred_check
        %p243 = pneg %p145
      $region22: #{spectral_transform.8} parent=11 // pred_check_branch
        %245 = sbr.rel (%p243) target = $region24
      $region23: #{spectral_transform.8} parent=11 // pred_region
        _
      $region24: #{spectral_transform.8} parent=11 // pred_fallthru
        _
      // Predicated region
      $region25: #{spectral_transform.8} parent=11 // pred_check
        %p246 = pneg %p166
      $region26: #{spectral_transform.8} parent=11 // pred_check_branch
        %248 = sbr.rel (%p246) target = $region28
      $region27: #{spectral_transform.8} parent=11 // pred_region
        _
      $region28: #{spectral_transform.8} parent=11 // pred_fallthru
        _
    $region12: #{spectral_transform.8} parent=5 // pred_fallthru
      _
    %p249 = scmp.lt.s32.totalorder %s14, 2
    // Predicated region
    $region29: #{spectral_transform.8} parent=5 // pred_check
      %p250 = pneg %p249
    $region30: #{spectral_transform.8} parent=5 // pred_check_branch
      %252 = sbr.rel (%p250) target = $region32
    $region31: #{spectral_transform.8} parent=5 // pred_region
      // Predicated region
      $region33: #{spectral_transform.8} parent=31 // pred_check
        %p253 = pneg %p48
      $region34: #{spectral_transform.8} parent=31 // pred_check_branch
        %255 = sbr.rel (%p253) target = $region36
      $region35: #{spectral_transform.8} parent=31 // pred_region
        %s256 = smul.u32 2, %s22
        %p257 = scmp.lt.s32.totalorder %s21, 1
        %s258 = scalar_select %p257, %s21, 1
        %p259 = scmp.lt.s32.totalorder %s256, 1
        %s260 = scalar_select %p259, %s256, 1
        %s261 = smul.addr %s258, 2
        %s262 = sadd.s32 %s260, %s261
        %s263 = smul.addr %s262, 2
        %s264 = scalar_lea.vmem %s0, %s263
        %s265 = smul.u32 2, %s22
      $region36: #{spectral_transform.8} parent=31 // pred_fallthru
        _
      // Predicated region
      $region37: #{spectral_transform.8} parent=31 // pred_check
        %p266 = pneg %p76
      $region38: #{spectral_transform.8} parent=31 // pred_check_branch
        %268 = sbr.rel (%p266) target = $region40
      $region39: #{spectral_transform.8} parent=31 // pred_region
        %s269 = smul.u32 2, %s22
        %p270 = scmp.lt.s32.totalorder %s21, 1
        %s271 = scalar_select %p270, %s21, 1
        %p272 = scmp.lt.s32.totalorder %s269, 1
        %s273 = scalar_select %p272, %s269, 1
        %s274 = smul.addr %s271, 2
        %s275 = sadd.s32 %s273, %s274
        %s276 = smul.addr %s275, 2
        %s277 = scalar_lea.vmem %s1, %s276
        %s278 = smul.u32 2, %s22
      $region40: #{spectral_transform.8} parent=31 // pred_fallthru
        _
    $region32: #{spectral_transform.8} parent=5 // pred_fallthru
      _
    %p279 = scmp.le.s32.totalorder 1, %s14
    %p280 = scmp.lt.s32.totalorder %s14, 3
    %p281 = pnand %p279, %p280
    %p282 = pneg %p281
    // Predicated region
    $region41: #{spectral_transform.8} parent=5 // pred_check
      _
    $region42: #{spectral_transform.8} parent=5 // pred_check_branch
      %284 = sbr.rel (%p281) target = $region44
    $region43: #{spectral_transform.8} parent=5 // pred_region
      %s285 = ssub.s32 %s14, 1
      %s286 = smul.u32 2, %s24
      %p287 = scmp.lt.s32.totalorder %s23, 1
      %s288 = scalar_select %p287, %s23, 1
      %p289 = scmp.lt.s32.totalorder %s286, 1
      %s290 = scalar_select %p289, %s286, 1
      %s291 = smul.addr %s288, 2
      %s292 = sadd.s32 %s290, %s291
      %s293 = smul.addr %s292, 2
      %s294 = scalar_lea.vmem %s0, %s293
      %p295 = pneg %p54
      %p296 = pneg %p51
      %s297 = smul.u32 2, %s24
      %p298 = scmp.lt.s32.totalorder %s23, 1
      %s299 = scalar_select %p298, %s23, 1
      %p300 = scmp.lt.s32.totalorder %s297, 1
      %s301 = scalar_select %p300, %s297, 1
      %s302 = smul.addr %s299, 2
      %s303 = sadd.s32 %s301, %s302
      %s304 = smul.addr %s303, 2
      %s305 = scalar_lea.vmem %s1, %s304
      %p306 = pneg %p82
      %p307 = pneg %p79
      %p308 = pneg %p103
      %p309 = pneg %p100
      %p310 = pneg %p124
      %p311 = pneg %p121
      %p312 = pneg %p145
      %p313 = pneg %p142
      %p314 = pneg %p166
      %p315 = pneg %p163
      %p316 = pneg %p194
      %p317 = pneg %p191
      %s318 = smul.u32 2, %s24
      %p319 = scmp.lt.s32.totalorder %s23, 1
      %s320 = scalar_select %p319, %s23, 1
      %p321 = scmp.lt.s32.totalorder %s318, 1
      %s322 = scalar_select %p321, %s318, 1
      %s323 = smul.addr %s320, 2
      %s324 = sadd.s32 %s322, %s323
      %s325 = smul.addr %s324, 2
      %s326 = scalar_lea.vmem %s6, %s325
      %p327 = pneg %p222
      %p328 = pneg %p219
      %s329 = smul.u32 2, %s24
      %p330 = scmp.lt.s32.totalorder %s23, 1
      %s331 = scalar_select %p330, %s23, 1
      %p332 = scmp.lt.s32.totalorder %s329, 1
      %s333 = scalar_select %p332, %s329, 1
      %s334 = smul.addr %s331, 2
      %s335 = sadd.s32 %s333, %s334
      %s336 = smul.addr %s335, 2
      %s337 = scalar_lea.vmem %s7, %s336
      %s338 = smul.u32 2, %s24
      %p339 = scmp.lt.s32.totalorder %s23, 1
      %s340 = scalar_select %p339, %s23, 1
      %p341 = scmp.lt.s32.totalorder %s338, 1
      %s342 = scalar_select %p341, %s338, 1
      %s343 = smul.addr %s340, 2
      %s344 = sadd.s32 %s342, %s343
      %s345 = smul.addr %s344, 2
      %s346 = scalar_lea.vmem %s0, %s345
      %s347 = smul.u32 2, %s24
      %s348 = smul.u32 2, %s24
      %p349 = scmp.lt.s32.totalorder %s23, 1
      %s350 = scalar_select %p349, %s23, 1
      %p351 = scmp.lt.s32.totalorder %s348, 1
      %s352 = scalar_select %p351, %s348, 1
      %s353 = smul.addr %s350, 2
      %s354 = sadd.s32 %s352, %s353
      %s355 = smul.addr %s354, 2
      %s356 = scalar_lea.vmem %s1, %s355
      %s357 = smul.u32 2, %s24
      %s358 = smul.u32 2, %s24
      %p359 = scmp.lt.s32.totalorder %s23, 1
      %s360 = scalar_select %p359, %s23, 1
      %p361 = scmp.lt.s32.totalorder %s358, 1
      %s362 = scalar_select %p361, %s358, 1
      %s363 = smul.addr %s360, 2
      %s364 = sadd.s32 %s362, %s363
      %s365 = smul.addr %s364, 2
      %s366 = scalar_lea.vmem %s6, %s365
      %s367 = smul.u32 2, %s24
      %s368 = smul.u32 2, %s24
      %p369 = scmp.lt.s32.totalorder %s23, 1
      %s370 = scalar_select %p369, %s23, 1
      %p371 = scmp.lt.s32.totalorder %s368, 1
      %s372 = scalar_select %p371, %s368, 1
      %s373 = smul.addr %s370, 2
      %s374 = sadd.s32 %s372, %s373
      %s375 = smul.addr %s374, 2
      %s376 = scalar_lea.vmem %s7, %s375
      %s377 = smul.u32 2, %s24
      %v379 = vld [vmem:[%s2] sm:$0xf]
      %v380 = vld [vmem:[%s346] sm:$0xf]
      %v381 = vld [vmem:[%s3] sm:$0xf]
      %v382 = vld [vmem:[%s356] sm:$0xf]
      %v385 = vunpack.c.l.s4 1983009808
      %v386 = vunpack.c.0.s8 %v385
      %v387 = vlaneseq
      %v388 = vshrl.u32 %v387, 7
      %v389 = vsub.s32 %v386, %v388
      %v390 = vrot.slane %v382, %v389
      %v391 = vcombine.high %v390, %v390
      %vm392 = vcmask 31744
      %v394 = vsel %vm392, %v381, 0
      %vm396 = vcmask 1041408
      %v398 = vsel %vm396, %v390, 0
      %v401 = vsel %vm396, %v391, 0
      %403 = vmatprep.subr.bf16.mxu0 %v401
      %404 = vmatpush1.bf16.msra.mxu0 %v398
      %405 = vmatprep.subr.bf16.mxu0 0
      %406 = vmatpush1.bf16.msra.mxu0 0
      %407 = vmatprep.subr.bf16.mxu0 0
      %408 = vmatpush1.bf16.msra.mxu0 0
      %409 = vmatprep.subr.bf16.mxu0 0
      %410 = vmatpush1.bf16.msra.mxu0 0
      %411 = vmatprep.subr.bf16.mxu0 0
      %412 = vmatpush1.bf16.msra.mxu0 0
      %413 = vmatprep.subr.bf16.mxu0 0
      %414 = vmatpush1.bf16.msra.mxu0 0
      %415 = vmatprep.subr.bf16.mxu0 0
      %416 = vmatpush1.bf16.msra.mxu0 0
      %417 = vmatprep.subr.bf16.mxu0 0
      %418 = vmatpush1.bf16.msra.mxu0 0
      %419 = vmatprep.subr.bf16.mxu0 0
      %420 = vmatpush1.bf16.msra.mxu0 0
      %421 = vmatprep.subr.bf16.mxu0 0
      %422 = vmatpush1.bf16.msra.mxu0 0
      %423 = vmatprep.subr.bf16.mxu0 0
      %424 = vmatpush1.bf16.msra.mxu0 0
      %425 = vmatprep.subr.bf16.mxu0 0
      %426 = vmatpush1.bf16.msra.mxu0 0
      %427 = vmatprep.subr.bf16.mxu0 0
      %428 = vmatpush1.bf16.msra.mxu0 0
      %429 = vmatprep.subr.bf16.mxu0 0
      %430 = vmatpush1.bf16.msra.mxu0 0
      %431 = vmatprep.subr.bf16.mxu0 0
      %432 = vmatpush1.bf16.msra.mxu0 0
      %433 = vmatprep.subr.bf16.mxu0 0
      %434 = vmatpush1.bf16.msra.mxu0 0
      %435 = vmatprep.mubr.bf16.mxu0 0
      %436 = vmatmul.mubr.bf16.gmra.mrb[0].mxu0 %v394
      %v437 = vpop.f32.mrb[0].mxu0
      %v438 = vadd.f32 0.0, %v437
      %v439 = vpop.f32.mrb[0].mxu0
      %v440 = vadd.f32 0.0, %v439
      %v441 = vpop.f32.mrb[0].mxu0
      %v442 = vpop.f32.mrb[0].mxu0
      %443 = vdwg.mxu0
      %v446 = vunpack.c.l.s4 1983009808
      %v447 = vunpack.c.0.s8 %v446
      %v448 = vlaneseq
      %v449 = vshrl.u32 %v448, 7
      %v450 = vsub.s32 %v447, %v449
      %v451 = vrot.slane %v380, %v450
      %v452 = vcombine.high %v451, %v451
      %v454 = vsel %vm392, %v379, 0
      %v457 = vsel %vm396, %v451, 0
      %v460 = vsel %vm396, %v452, 0
      %462 = vmatprep.subr.bf16.mxu0 %v460
      %463 = vmatpush1.bf16.msra.mxu0 %v457
      %464 = vmatprep.subr.bf16.mxu0 0
      %465 = vmatpush1.bf16.msra.mxu0 0
      %466 = vmatprep.subr.bf16.mxu0 0
      %467 = vmatpush1.bf16.msra.mxu0 0
      %468 = vmatprep.subr.bf16.mxu0 0
      %469 = vmatpush1.bf16.msra.mxu0 0
      %470 = vmatprep.subr.bf16.mxu0 0
      %471 = vmatpush1.bf16.msra.mxu0 0
      %472 = vmatprep.subr.bf16.mxu0 0
      %473 = vmatpush1.bf16.msra.mxu0 0
      %474 = vmatprep.subr.bf16.mxu0 0
      %475 = vmatpush1.bf16.msra.mxu0 0
      %476 = vmatprep.subr.bf16.mxu0 0
      %477 = vmatpush1.bf16.msra.mxu0 0
      %478 = vmatprep.subr.bf16.mxu0 0
      %479 = vmatpush1.bf16.msra.mxu0 0
      %480 = vmatprep.subr.bf16.mxu0 0
      %481 = vmatpush1.bf16.msra.mxu0 0
      %482 = vmatprep.subr.bf16.mxu0 0
      %483 = vmatpush1.bf16.msra.mxu0 0
      %484 = vmatprep.subr.bf16.mxu0 0
      %485 = vmatpush1.bf16.msra.mxu0 0
      %486 = vmatprep.subr.bf16.mxu0 0
      %487 = vmatpush1.bf16.msra.mxu0 0
      %488 = vmatprep.subr.bf16.mxu0 0
      %489 = vmatpush1.bf16.msra.mxu0 0
      %490 = vmatprep.subr.bf16.mxu0 0
      %491 = vmatpush1.bf16.msra.mxu0 0
      %492 = vmatprep.subr.bf16.mxu0 0
      %493 = vmatpush1.bf16.msra.mxu0 0
      %494 = vmatprep.mubr.bf16.mxu0 0
      %495 = vmatmul.mubr.bf16.gmra.mrb[0].mxu0 %v454
      %v496 = vpop.f32.mrb[0].mxu0
      %v497 = vadd.f32 %v438, %v496
      %v498 = vpop.f32.mrb[0].mxu0
      %v499 = vadd.f32 %v440, %v498
      %v500 = vpop.f32.mrb[0].mxu0
      %v501 = vpop.f32.mrb[0].mxu0
      %502 = vdwg.mxu0
      %v503 = vld [vmem:[%s4] sm:$0xff]
      %505 = vset.pattern.permute.xlu0 0
      %506 = vperm.xlu0 %505, %v503
      %v507 = vpop.permute.xlu0 %506
      %v509 = vmul.f32 %v497, %v507
      %v510 = vmul.f32 %v499, %v507
      %v511 = vld [vmem:[%s5] sm:$0xff]
      %513 = vset.pattern.permute.xlu0 0
      %514 = vperm.xlu0 %513, %v511
      %v515 = vpop.permute.xlu0 %514
      %v517 = vadd.f32 %v509, %v515
      %v518 = vadd.f32 %v510, %v515
      %v519 = vmax.f32 %v517, 0.0
      %v520 = vmax.f32 %v518, 0.0
      %v521 = vpack.c.bf16 %v519, %v519
      %v522 = vpack.c.bf16 %v520, %v520
      %v525 = vcombine.low %v521, %v522
      %v527 = vunpack.c.l.s4 1983009808
      %v528 = vunpack.c.0.s8 %v527
      %v529 = vlaneseq
      %v530 = vshrl.u32 %v529, 7
      %v531 = vsub.s32 %v528, %v530
      %v532 = vrot.slane %v525, %v531
      %534 = vst [vmem:[%s366] sm:$0xf] %v532
      %v535 = vcombine.high %v532, %v532
      %537 = vst [vmem:[%s376] sm:$0xf] %v535
      %s538 = smul.u32 2, %s24
      %p539 = scmp.lt.s32.totalorder %s23, 1
      %s540 = scalar_select %p539, %s23, 1
      %p541 = scmp.lt.s32.totalorder %s538, 1
      %s542 = scalar_select %p541, %s538, 1
      %s543 = smul.addr %s540, 2
      %s544 = sadd.s32 %s542, %s543
      %s545 = smul.addr %s544, 2
      %s546 = scalar_lea.vmem %s6, %s545
      %s547 = smul.u32 2, %s24
      %p548 = scmp.lt.s32.totalorder %s23, 1
      %s549 = scalar_select %p548, %s23, 1
      %p550 = scmp.lt.s32.totalorder %s547, 1
      %s551 = scalar_select %p550, %s547, 1
      %s552 = smul.addr %s549, 2
      %s553 = sadd.s32 %s551, %s552
      %s554 = smul.addr %s553, 2
      %s555 = scalar_lea.vmem %s7, %s554
      // Predicated region
      $region45: #{spectral_transform.8} parent=43 // pred_check
        %p556 = pneg %p191
      $region46: #{spectral_transform.8} parent=43 // pred_check_branch
        %558 = sbr.rel (%p556) target = $region48
      $region47: #{spectral_transform.8} parent=43 // pred_region
        %s559 = smul.u32 2, %s24
      $region48: #{spectral_transform.8} parent=43 // pred_fallthru
        _
      // Predicated region
      $region49: #{spectral_transform.8} parent=43 // pred_check
        %p560 = pneg %p219
      $region50: #{spectral_transform.8} parent=43 // pred_check_branch
        %562 = sbr.rel (%p560) target = $region52
      $region51: #{spectral_transform.8} parent=43 // pred_region
        %s563 = smul.u32 2, %s24
      $region52: #{spectral_transform.8} parent=43 // pred_fallthru
        _
    $region44: #{spectral_transform.8} parent=5 // pred_fallthru
      _
    %p564 = scmp.le.s32.totalorder 2, %s14
    // Predicated region
    $region53: #{spectral_transform.8} parent=5 // pred_check
      %p565 = pneg %p564
    $region54: #{spectral_transform.8} parent=5 // pred_check_branch
      %567 = sbr.rel (%p565) target = $region56
    $region55: #{spectral_transform.8} parent=5 // pred_region
      %s568 = ssub.s32 %s14, 2
      // Predicated region
      $region57: #{spectral_transform.8} parent=55 // pred_check
        %p569 = pneg %p197
      $region58: #{spectral_transform.8} parent=55 // pred_check_branch
        %571 = sbr.rel (%p569) target = $region60
      $region59: #{spectral_transform.8} parent=55 // pred_region
        %s572 = smul.u32 2, %s26
        %p573 = scmp.lt.s32.totalorder %s25, 1
        %s574 = scalar_select %p573, %s25, 1
        %p575 = scmp.lt.s32.totalorder %s572, 1
        %s576 = scalar_select %p575, %s572, 1
        %s577 = smul.addr %s574, 2
        %s578 = sadd.s32 %s576, %s577
        %s579 = smul.addr %s578, 2
        %s580 = scalar_lea.vmem %s6, %s579
      $region60: #{spectral_transform.8} parent=55 // pred_fallthru
        _
      // Predicated region
      $region61: #{spectral_transform.8} parent=55 // pred_check
        %p581 = pneg %p225
      $region62: #{spectral_transform.8} parent=55 // pred_check_branch
        %583 = sbr.rel (%p581) target = $region64
      $region63: #{spectral_transform.8} parent=55 // pred_region
        %s584 = smul.u32 2, %s26
        %p585 = scmp.lt.s32.totalorder %s25, 1
        %s586 = scalar_select %p585, %s25, 1
        %p587 = scmp.lt.s32.totalorder %s584, 1
        %s588 = scalar_select %p587, %s584, 1
        %s589 = smul.addr %s586, 2
        %s590 = sadd.s32 %s588, %s589
        %s591 = smul.addr %s590, 2
        %s592 = scalar_lea.vmem %s7, %s591
      $region64: #{spectral_transform.8} parent=55 // pred_fallthru
        _
    $region56: #{spectral_transform.8} parent=5 // pred_fallthru
      _
  $region6: #{spectral_transform.8} parent=0 // loop_footer
    %s18 = sadd.s32 1, %s14
  $region7: #{spectral_transform.8} parent=0 // loop_footer_branch
    %13 = sbr.rel target = $region3
  $region8: #{spectral_transform.8} parent=0 // loop_exit
    _

// kernel: reverse.0
$region0: #{reverse.0}
  %s0 = inlined_call_operand.vmem [shape: f32[2,4,16,7], index: 0, kind: input, shape index: {}]
  %s1 = inlined_call_operand.vmem [shape: f32[2,4,16,7], index: 1, kind: output, shape index: {}]
  $region1: #{reverse.0} parent=0
    #allocation0 [shape = 'u8[65536]{0}', space=vmem, size = 0x10000, scoped, tag = 'operand span for operand 0']
    #allocation1 [shape = 'u8[32768]{0}', space=vmem, size = 0x8000, scoped, tag = 'operand span for operand 1']
    %s2 = scalar_lea.vmem [#allocation0], 8
    // Predicated region
    $region2: #{reverse.0} parent=1 // pred_check
      _
    $region3: #{reverse.0} parent=1 // pred_check_branch
      %4 = sbr.rel (0) target = $region5
    $region4: #{reverse.0} parent=1 // pred_region
      // Predicated region
      $region6: #{reverse.0} parent=4 // pred_check
        _
      $region7: #{reverse.0} parent=4 // pred_check_branch
        %6 = sbr.rel (0) target = $region9
      $region8: #{reverse.0} parent=4 // pred_region
        // Predicated region
        $region21: #{reverse.0} parent=8 // pred_check
          _
        $region22: #{reverse.0} parent=8 // pred_check_branch
          %35 = sbr.rel (0) target = $region24
        $region23: #{reverse.0} parent=8 // pred_region
          loop: start=0, step=1, limit=1
          $region25: #{reverse.0} parent=23 // loop_pre_header
            _
          $region26: #{reverse.0} parent=23 // loop_header
            %s37 = sphi 0, %s41
            %p38 = scmp.ge.s32.totalorder %s37, 1
            %s42 = sphi %s0, %s0
            %s43 = sphi %s2, %s2
          $region27: #{reverse.0} parent=23 // loop_header_branch
            %40 = sbr.rel (%p38) target = $region31
          $region28: #{reverse.0} parent=23 // loop_body
            %v44 = vld [vmem:[%s42] sm:$0xff]
            %45 = vst [vmem:[%s43] sm:$0xff] %v44
            %v46 = vld [vmem:[%s42 + $0x8] sm:$0xff]
            %47 = vst [vmem:[%s43 + $0x10] sm:$0xff] %v46
            %v48 = vld [vmem:[%s42 + $0x10] sm:$0xff]
            %49 = vst [vmem:[%s43 + $0x20] sm:$0xff] %v48
            %v50 = vld [vmem:[%s42 + $0x18] sm:$0xff]
            %51 = vst [vmem:[%s43 + $0x30] sm:$0xff] %v50
            %v52 = vld [vmem:[%s42 + $0x20] sm:$0xff]
            %53 = vst [vmem:[%s43 + $0x40] sm:$0xff] %v52
            %v54 = vld [vmem:[%s42 + $0x28] sm:$0xff]
            %55 = vst [vmem:[%s43 + $0x50] sm:$0xff] %v54
            %v56 = vld [vmem:[%s42 + $0x30] sm:$0xff]
            %57 = vst [vmem:[%s43 + $0x60] sm:$0xff] %v56
            %v58 = vld [vmem:[%s42 + $0x38] sm:$0xff]
            %59 = vst [vmem:[%s43 + $0x70] sm:$0xff] %v58
          $region29: #{reverse.0} parent=23 // loop_footer
            %s41 = sadd.s32 1, %s37
          $region30: #{reverse.0} parent=23 // loop_footer_branch
            %36 = sbr.rel target = $region26
          $region31: #{reverse.0} parent=23 // loop_exit
            _
        $region24: #{reverse.0} parent=8 // pred_fallthru
          _
        // Predicated region
        $region32: #{reverse.0} parent=8 // pred_check
          _
        $region33: #{reverse.0} parent=8 // pred_check_branch
          %61 = sbr.rel target = $region35
        $region34: #{reverse.0} parent=8 // pred_region
          _
        $region35: #{reverse.0} parent=8 // pred_fallthru
          _
      $region9: #{reverse.0} parent=4 // pred_fallthru
        _
      // Predicated region
      $region10: #{reverse.0} parent=4 // pred_check
        _
      $region11: #{reverse.0} parent=4 // pred_check_branch
        %8 = sbr.rel target = $region13
      $region12: #{reverse.0} parent=4 // pred_region
        loop: start=0, step=1, limit=1
        $region14: #{reverse.0} parent=12 // loop_pre_header
          _
        $region15: #{reverse.0} parent=12 // loop_header
          %s11 = sphi 0, %s15
          %p12 = scmp.ge.s32.totalorder %s11, 1
          %s16 = sphi %s0, %s0
          %s17 = sphi %s2, %s2
        $region16: #{reverse.0} parent=12 // loop_header_branch
          %14 = sbr.rel (%p12) target = $region20
        $region17: #{reverse.0} parent=12 // loop_body
          %v18 = vld [vmem:[%s16] sm:$0xff]
          %19 = vst [vmem:[%s17] sm:$0xff] %v18
          %v20 = vld [vmem:[%s16 + $0x8] sm:$0xff]
          %21 = vst [vmem:[%s17 + $0x10] sm:$0xff] %v20
          %v22 = vld [vmem:[%s16 + $0x10] sm:$0xff]
          %23 = vst [vmem:[%s17 + $0x20] sm:$0xff] %v22
          %v24 = vld [vmem:[%s16 + $0x18] sm:$0xff]
          %25 = vst [vmem:[%s17 + $0x30] sm:$0xff] %v24
          %v26 = vld [vmem:[%s16 + $0x20] sm:$0xff]
          %27 = vst [vmem:[%s17 + $0x40] sm:$0xff] %v26
          %v28 = vld [vmem:[%s16 + $0x28] sm:$0xff]
          %29 = vst [vmem:[%s17 + $0x50] sm:$0xff] %v28
          %v30 = vld [vmem:[%s16 + $0x30] sm:$0xff]
          %31 = vst [vmem:[%s17 + $0x60] sm:$0xff] %v30
          %v32 = vld [vmem:[%s16 + $0x38] sm:$0xff]
          %33 = vst [vmem:[%s17 + $0x70] sm:$0xff] %v32
        $region18: #{reverse.0} parent=12 // loop_footer
          %s15 = sadd.s32 1, %s11
        $region19: #{reverse.0} parent=12 // loop_footer_branch
          %10 = sbr.rel target = $region15
        $region20: #{reverse.0} parent=12 // loop_exit
          _
      $region13: #{reverse.0} parent=4 // pred_fallthru
        _
    $region5: #{reverse.0} parent=1 // pred_fallthru
      _
    %62 = vnop
    %s63 = scalar_lea.vmem [#allocation0], 7
    %v64 = vld [vmem:[%s63] ss:$-1 sm:$0xff]
    %v65 = vrot.slane %v64, 1
    %66 = vst [vmem:[#allocation1] sm:$0xff] %v65
    %s67 = scalar_lea.vmem [#allocation0], 8
    %s68 = scalar_lea.vmem %s67, 7 [#allocation0]
    %v69 = vld [vmem:[%s68] ss:$-1 sm:$0xff]
    %v70 = vrot.slane %v69, 1
    %v71 = vlaneseq
    %v72 = vshrl.u32 %v71, 7
    %vm73 = vcmp.lt.s32.totalorder %v72, 7
    %74 = vst.msk [vmem:[#allocation1] sm:$0xff] %vm73, %v70
    %s75 = scalar_lea.vmem [#allocation1], 8
    %s76 = scalar_lea.vmem [#allocation0], 16
    %s77 = scalar_lea.vmem %s76, 7 [#allocation0]
    %v78 = vld [vmem:[%s77] ss:$-1 sm:$0xff]
    %v79 = vrot.slane %v78, 1
    %80 = vst [vmem:[%s75] sm:$0xff] %v79
    %s81 = scalar_lea.vmem %s76, 8 [#allocation0]
    %s82 = scalar_lea.vmem %s81, 7 [#allocation0]
    %v83 = vld [vmem:[%s82] ss:$-1 sm:$0xff]
    %v84 = vrot.slane %v83, 1
    %v85 = vlaneseq
    %v86 = vshrl.u32 %v85, 7
    %vm87 = vcmp.lt.s32.totalorder %v86, 7
    %88 = vst.msk [vmem:[%s75] sm:$0xff] %vm87, %v84
    %s89 = scalar_lea.vmem [#allocation1], 16
    %s90 = scalar_lea.vmem [#allocation0], 32
    %s91 = scalar_lea.vmem %s90, 7 [#allocation0]
    %v92 = vld [vmem:[%s91] ss:$-1 sm:$0xff]
    %v93 = vrot.slane %v92, 1
    %94 = vst [vmem:[%s89] sm:$0xff] %v93
    %s95 = scalar_lea.vmem %s90, 8 [#allocation0]
    %s96 = scalar_lea.vmem %s95, 7 [#allocation0]
    %v97 = vld [vmem:[%s96] ss:$-1 sm:$0xff]
    %v98 = vrot.slane %v97, 1
    %v99 = vlaneseq
    %v100 = vshrl.u32 %v99, 7
    %vm101 = vcmp.lt.s32.totalorder %v100, 7
    %102 = vst.msk [vmem:[%s89] sm:$0xff] %vm101, %v98
    %s103 = scalar_lea.vmem [#allocation1], 24
    %s104 = scalar_lea.vmem [#allocation0], 48
    %s105 = scalar_lea.vmem %s104, 7 [#allocation0]
    %v106 = vld [vmem:[%s105] ss:$-1 sm:$0xff]
    %v107 = vrot.slane %v106, 1
    %108 = vst [vmem:[%s103] sm:$0xff] %v107
    %s109 = scalar_lea.vmem %s104, 8 [#allocation0]
    %s110 = scalar_lea.vmem %s109, 7 [#allocation0]
    %v111 = vld [vmem:[%s110] ss:$-1 sm:$0xff]
    %v112 = vrot.slane %v111, 1
    %v113 = vlaneseq
    %v114 = vshrl.u32 %v113, 7
    %vm115 = vcmp.lt.s32.totalorder %v114, 7
    %116 = vst.msk [vmem:[%s103] sm:$0xff] %vm115, %v112
    %s117 = scalar_lea.vmem [#allocation1], 32
    %s118 = scalar_lea.vmem [#allocation0], 64
    %s119 = scalar_lea.vmem %s118, 7 [#allocation0]
    %v120 = vld [vmem:[%s119] ss:$-1 sm:$0xff]
    %v121 = vrot.slane %v120, 1
    %122 = vst [vmem:[%s117] sm:$0xff] %v121
    %s123 = scalar_lea.vmem %s118, 8 [#allocation0]
    %s124 = scalar_lea.vmem %s123, 7 [#allocation0]
    %v125 = vld [vmem:[%s124] ss:$-1 sm:$0xff]
    %v126 = vrot.slane %v125, 1
    %v127 = vlaneseq
    %v128 = vshrl.u32 %v127, 7
    %vm129 = vcmp.lt.s32.totalorder %v128, 7
    %130 = vst.msk [vmem:[%s117] sm:$0xff] %vm129, %v126
    %s131 = scalar_lea.vmem [#allocation1], 40
    %s132 = scalar_lea.vmem [#allocation0], 80
    %s133 = scalar_lea.vmem %s132, 7 [#allocation0]
    %v134 = vld [vmem:[%s133] ss:$-1 sm:$0xff]
    %v135 = vrot.slane %v134, 1
    %136 = vst [vmem:[%s131] sm:$0xff] %v135
    %s137 = scalar_lea.vmem %s132, 8 [#allocation0]
    %s138 = scalar_lea.vmem %s137, 7 [#allocation0]
    %v139 = vld [vmem:[%s138] ss:$-1 sm:$0xff]
    %v140 = vrot.slane %v139, 1
    %v141 = vlaneseq
    %v142 = vshrl.u32 %v141, 7
    %vm143 = vcmp.lt.s32.totalorder %v142, 7
    %144 = vst.msk [vmem:[%s131] sm:$0xff] %vm143, %v140
    %s145 = scalar_lea.vmem [#allocation1], 48
    %s146 = scalar_lea.vmem [#allocation0], 96
    %s147 = scalar_lea.vmem %s146, 7 [#allocation0]
    %v148 = vld [vmem:[%s147] ss:$-1 sm:$0xff]
    %v149 = vrot.slane %v148, 1
    %150 = vst [vmem:[%s145] sm:$0xff] %v149
    %s151 = scalar_lea.vmem %s146, 8 [#allocation0]
    %s152 = scalar_lea.vmem %s151, 7 [#allocation0]
    %v153 = vld [vmem:[%s152] ss:$-1 sm:$0xff]
    %v154 = vrot.slane %v153, 1
    %v155 = vlaneseq
    %v156 = vshrl.u32 %v155, 7
    %vm157 = vcmp.lt.s32.totalorder %v156, 7
    %158 = vst.msk [vmem:[%s145] sm:$0xff] %vm157, %v154
    %s159 = scalar_lea.vmem [#allocation1], 56
    %s160 = scalar_lea.vmem [#allocation0], 112
    %s161 = scalar_lea.vmem %s160, 7 [#allocation0]
    %v162 = vld [vmem:[%s161] ss:$-1 sm:$0xff]
    %v163 = vrot.slane %v162, 1
    %164 = vst [vmem:[%s159] sm:$0xff] %v163
    %s165 = scalar_lea.vmem %s160, 8 [#allocation0]
    %s166 = scalar_lea.vmem %s165, 7 [#allocation0]
    %v167 = vld [vmem:[%s166] ss:$-1 sm:$0xff]
    %v168 = vrot.slane %v167, 1
    %v169 = vlaneseq
    %v170 = vshrl.u32 %v169, 7
    %vm171 = vcmp.lt.s32.totalorder %v170, 7
    %172 = vst.msk [vmem:[%s159] sm:$0xff] %vm171, %v168
    // Predicated region
    $region36: #{reverse.0} parent=1 // pred_check
      _
    $region37: #{reverse.0} parent=1 // pred_check_branch
      %174 = sbr.rel (0) target = $region39
    $region38: #{reverse.0} parent=1 // pred_region
      // Predicated region
      $region40: #{reverse.0} parent=38 // pred_check
        _
      $region41: #{reverse.0} parent=38 // pred_check_branch
        %176 = sbr.rel (0) target = $region43
      $region42: #{reverse.0} parent=38 // pred_region
        // Predicated region
        $region55: #{reverse.0} parent=42 // pred_check
          _
        $region56: #{reverse.0} parent=42 // pred_check_branch
          %205 = sbr.rel (0) target = $region58
        $region57: #{reverse.0} parent=42 // pred_region
          loop: start=0, step=1, limit=1
          $region59: #{reverse.0} parent=57 // loop_pre_header
            _
          $region60: #{reverse.0} parent=57 // loop_header
            %s207 = sphi 0, %s211
            %p208 = scmp.ge.s32.totalorder %s207, 1
            %s212 = sphi [#allocation1], [#allocation1]
            %s213 = sphi %s1, %s1
          $region61: #{reverse.0} parent=57 // loop_header_branch
            %210 = sbr.rel (%p208) target = $region65
          $region62: #{reverse.0} parent=57 // loop_body
            %v214 = vld [vmem:[%s212] sm:$0xff]
            %215 = vst [vmem:[%s213] sm:$0xff] %v214
            %v216 = vld [vmem:[%s212 + $0x8] sm:$0xff]
            %217 = vst [vmem:[%s213 + $0x8] sm:$0xff] %v216
            %v218 = vld [vmem:[%s212 + $0x10] sm:$0xff]
            %219 = vst [vmem:[%s213 + $0x10] sm:$0xff] %v218
            %v220 = vld [vmem:[%s212 + $0x18] sm:$0xff]
            %221 = vst [vmem:[%s213 + $0x18] sm:$0xff] %v220
            %v222 = vld [vmem:[%s212 + $0x20] sm:$0xff]
            %223 = vst [vmem:[%s213 + $0x20] sm:$0xff] %v222
            %v224 = vld [vmem:[%s212 + $0x28] sm:$0xff]
            %225 = vst [vmem:[%s213 + $0x28] sm:$0xff] %v224
            %v226 = vld [vmem:[%s212 + $0x30] sm:$0xff]
            %227 = vst [vmem:[%s213 + $0x30] sm:$0xff] %v226
            %v228 = vld [vmem:[%s212 + $0x38] sm:$0xff]
            %229 = vst [vmem:[%s213 + $0x38] sm:$0xff] %v228
          $region63: #{reverse.0} parent=57 // loop_footer
            %s211 = sadd.s32 1, %s207
          $region64: #{reverse.0} parent=57 // loop_footer_branch
            %206 = sbr.rel target = $region60
          $region65: #{reverse.0} parent=57 // loop_exit
            _
        $region58: #{reverse.0} parent=42 // pred_fallthru
          _
        // Predicated region
        $region66: #{reverse.0} parent=42 // pred_check
          _
        $region67: #{reverse.0} parent=42 // pred_check_branch
          %231 = sbr.rel target = $region69
        $region68: #{reverse.0} parent=42 // pred_region
          _
        $region69: #{reverse.0} parent=42 // pred_fallthru
          _
      $region43: #{reverse.0} parent=38 // pred_fallthru
        _
      // Predicated region
      $region44: #{reverse.0} parent=38 // pred_check
        _
      $region45: #{reverse.0} parent=38 // pred_check_branch
        %178 = sbr.rel target = $region47
      $region46: #{reverse.0} parent=38 // pred_region
        loop: start=0, step=1, limit=1
        $region48: #{reverse.0} parent=46 // loop_pre_header
          _
        $region49: #{reverse.0} parent=46 // loop_header
          %s181 = sphi 0, %s185
          %p182 = scmp.ge.s32.totalorder %s181, 1
          %s186 = sphi [#allocation1], [#allocation1]
          %s187 = sphi %s1, %s1
        $region50: #{reverse.0} parent=46 // loop_header_branch
          %184 = sbr.rel (%p182) target = $region54
        $region51: #{reverse.0} parent=46 // loop_body
          %v188 = vld [vmem:[%s186] sm:$0xff]
          %189 = vst [vmem:[%s187] sm:$0xff] %v188
          %v190 = vld [vmem:[%s186 + $0x8] sm:$0xff]
          %191 = vst [vmem:[%s187 + $0x8] sm:$0xff] %v190
          %v192 = vld [vmem:[%s186 + $0x10] sm:$0xff]
          %193 = vst [vmem:[%s187 + $0x10] sm:$0xff] %v192
          %v194 = vld [vmem:[%s186 + $0x18] sm:$0xff]
          %195 = vst [vmem:[%s187 + $0x18] sm:$0xff] %v194
          %v196 = vld [vmem:[%s186 + $0x20] sm:$0xff]
          %197 = vst [vmem:[%s187 + $0x20] sm:$0xff] %v196
          %v198 = vld [vmem:[%s186 + $0x28] sm:$0xff]
          %199 = vst [vmem:[%s187 + $0x28] sm:$0xff] %v198
          %v200 = vld [vmem:[%s186 + $0x30] sm:$0xff]
          %201 = vst [vmem:[%s187 + $0x30] sm:$0xff] %v200
          %v202 = vld [vmem:[%s186 + $0x38] sm:$0xff]
          %203 = vst [vmem:[%s187 + $0x38] sm:$0xff] %v202
        $region52: #{reverse.0} parent=46 // loop_footer
          %s185 = sadd.s32 1, %s181
        $region53: #{reverse.0} parent=46 // loop_footer_branch
          %180 = sbr.rel target = $region49
        $region54: #{reverse.0} parent=46 // loop_exit
          _
      $region47: #{reverse.0} parent=38 // pred_fallthru
        _
    $region39: #{reverse.0} parent=1 // pred_fallthru
      _
    %232 = vnop

// kernel: spectral_transform.9
$region0: #{spectral_transform.9}
  #allocation0 [shape = 'u32[]', space=smem, size = 0x4, offset = 0x4, fixed_abs, tag = 'smem constant byte address 0x4 - core index']
  #allocation1 [shape = 'u32[144,128]{1,0:T(1,128)}', space=vmem, size = 0x12000, scoped, tag = 'internal scratch']
  %s0 = inlined_call_operand.vmem [shape: bf16[2,4,256], index: 0, kind: input, shape index: {}]
  %s1 = inlined_call_operand.vmem [shape: f32[2,4,256], index: 1, kind: input, shape index: {}]
  %s2 = inlined_call_operand.vmem [shape: f32[4,1], index: 2, kind: input, shape index: {}]
  %s3 = inlined_call_operand.vmem [shape: f32[4,1], index: 3, kind: input, shape index: {}]
  %s4 = inlined_call_operand.vmem [shape: bf16[8,4], index: 4, kind: input, shape index: {}]
  %s5 = inlined_call_operand.vmem [shape: f32[2,8,256], index: 5, kind: output, shape index: {}]
  %s6 = sld [smem:[#allocation0]]
  $region53: #{spectral_transform.9} parent=0
    _
  %s8 = ssub.s32 1, %s6
  %s9 = scalar_select 0, %s8, %s6
  loop: start=0, step=1, limit=4
  $region2: #{spectral_transform.9} parent=0 // loop_pre_header
    _
  $region3: #{spectral_transform.9} parent=0 // loop_header
    %s11 = sphi 0, %s15
    %p12 = scmp.ge.s32.totalorder %s11, 4
    %s18 = sphi 0, %s30
    %s19 = sphi 0, %s26
    %s20 = sphi 0, %s18
    %s21 = sphi 0, %s19
    %s22 = sphi 0, %s20
    %s23 = sphi 0, %s21
    %s35 = sphi 0, %s37
    %s38 = sphi 0, %s35
    %s39 = sphi 0, %s38
    %s55 = sphi 0, %s39
    %s63 = sphi 0, %s65
    %s66 = sphi 0, %s63
    %s67 = sphi 0, %s66
    %s83 = sphi 0, %s67
    %s87 = sphi 0, %s87
    %s89 = sphi 0, %s87
    %s90 = sphi 0, %s89
    %s104 = sphi 0, %s90
    %s108 = sphi 0, %s108
    %s110 = sphi 0, %s108
    %s111 = sphi 0, %s110
    %s125 = sphi 0, %s111
    %s129 = sphi 0, %s129
    %s131 = sphi 0, %s129
    %s132 = sphi 0, %s131
    %s146 = sphi 0, %s132
    %s154 = sphi 0, %s156
    %s157 = sphi 0, %s154
    %s158 = sphi 0, %s157
    %s174 = sphi 0, %s158
  $region4: #{spectral_transform.9} parent=0 // loop_header_branch
    %14 = sbr.rel (%p12) target = $region8
  $region5: #{spectral_transform.9} parent=0 // loop_body
    %s16 = ssub.s32 %s11, 1
    %s17 = ssub.s32 %s11, 2
    %s24 = sadd.s32 1, %s19
    %p25 = scmp.ge.s32.totalorder %s24, 1
    %s26 = scalar_select %p25, 0, %s24
    %s27 = sadd.s32 1, %s18
    %s28 = scalar_select %p25, %s27, %s18
    %p29 = scmp.ge.s32.totalorder %s28, 2
    %s30 = scalar_select %p29, 0, %s28
    %s31 = ssub.s32 %s18, %s30
    %s32 = ssub.s32 %s19, %s26
    %s33 = sor.u32 %s31, %s32
    %p34 = scmp.eq.s32.totalorder %s33, 0
    %s36 = sadd.s32 %s35, 1
    %s37 = scalar_select %p34, %s35, %s36
    %p40 = pneg %p34
    %p41 = scmp.eq.s32.totalorder %s11, 1
    %p42 = por %p40, %p41
    %p43 = scmp.ne.s32.totalorder %s35, %s38
    %p44 = scmp.eq.s32.totalorder %s11, 0
    %p45 = por %p43, %p44
    %p46 = scmp.ne.s32.totalorder %s35, %s38
    %p47 = scmp.eq.s32.totalorder %s16, 1
    %p48 = por %p46, %p47
    %p49 = scmp.ne.s32.totalorder %s38, %s39
    %p50 = scmp.eq.s32.totalorder %s16, 0
    %p51 = por %p49, %p50
    %p52 = scmp.ne.s32.totalorder %s38, %s39
    %p53 = scmp.eq.s32.totalorder %s17, 1
    %p54 = por %p52, %p53
    %p56 = scmp.ne.s32.totalorder %s39, %s55
    %p57 = scmp.eq.s32.totalorder %s17, 0
    %p58 = por %p56, %p57
    %s59 = ssub.s32 %s18, %s30
    %s60 = ssub.s32 %s19, %s26
    %s61 = sor.u32 %s59, %s60
    %p62 = scmp.eq.s32.totalorder %s61, 0
    %s64 = sadd.s32 %s63, 1
    %s65 = scalar_select %p62, %s63, %s64
    %p68 = pneg %p62
    %p69 = scmp.eq.s32.totalorder %s11, 1
    %p70 = por %p68, %p69
    %p71 = scmp.ne.s32.totalorder %s63, %s66
    %p72 = scmp.eq.s32.totalorder %s11, 0
    %p73 = por %p71, %p72
    %p74 = scmp.ne.s32.totalorder %s63, %s66
    %p75 = scmp.eq.s32.totalorder %s16, 1
    %p76 = por %p74, %p75
    %p77 = scmp.ne.s32.totalorder %s66, %s67
    %p78 = scmp.eq.s32.totalorder %s16, 0
    %p79 = por %p77, %p78
    %p80 = scmp.ne.s32.totalorder %s66, %s67
    %p81 = scmp.eq.s32.totalorder %s17, 1
    %p82 = por %p80, %p81
    %p84 = scmp.ne.s32.totalorder %s67, %s83
    %p85 = scmp.eq.s32.totalorder %s17, 0
    %p86 = por %p84, %p85
    %s88 = sadd.s32 %s87, 1
    %p91 = scmp.eq.s32.totalorder %s11, 1
    %p92 = scmp.ne.s32.totalorder %s87, %s89
    %p93 = scmp.eq.s32.totalorder %s11, 0
    %p94 = por %p92, %p93
    %p95 = scmp.ne.s32.totalorder %s87, %s89
    %p96 = scmp.eq.s32.totalorder %s16, 1
    %p97 = por %p95, %p96
    %p98 = scmp.ne.s32.totalorder %s89, %s90
    %p99 = scmp.eq.s32.totalorder %s16, 0
    %p100 = por %p98, %p99
    %p101 = scmp.ne.s32.totalorder %s89, %s90
    %p102 = scmp.eq.s32.totalorder %s17, 1
    %p103 = por %p101, %p102
    %p105 = scmp.ne.s32.totalorder %s90, %s104
    %p106 = scmp.eq.s32.totalorder %s17, 0
    %p107 = por %p105, %p106
    %s109 = sadd.s32 %s108, 1
    %p112 = scmp.eq.s32.totalorder %s11, 1
    %p113 = scmp.ne.s32.totalorder %s108, %s110
    %p114 = scmp.eq.s32.totalorder %s11, 0
    %p115 = por %p113, %p114
    %p116 = scmp.ne.s32.totalorder %s108, %s110
    %p117 = scmp.eq.s32.totalorder %s16, 1
    %p118 = por %p116, %p117
    %p119 = scmp.ne.s32.totalorder %s110, %s111
    %p120 = scmp.eq.s32.totalorder %s16, 0
    %p121 = por %p119, %p120
    %p122 = scmp.ne.s32.totalorder %s110, %s111
    %p123 = scmp.eq.s32.totalorder %s17, 1
    %p124 = por %p122, %p123
    %p126 = scmp.ne.s32.totalorder %s111, %s125
    %p127 = scmp.eq.s32.totalorder %s17, 0
    %p128 = por %p126, %p127
    %s130 = sadd.s32 %s129, 1
    %p133 = scmp.eq.s32.totalorder %s11, 1
    %p134 = scmp.ne.s32.totalorder %s129, %s131
    %p135 = scmp.eq.s32.totalorder %s11, 0
    %p136 = por %p134, %p135
    %p137 = scmp.ne.s32.totalorder %s129, %s131
    %p138 = scmp.eq.s32.totalorder %s16, 1
    %p139 = por %p137, %p138
    %p140 = scmp.ne.s32.totalorder %s131, %s132
    %p141 = scmp.eq.s32.totalorder %s16, 0
    %p142 = por %p140, %p141
    %p143 = scmp.ne.s32.totalorder %s131, %s132
    %p144 = scmp.eq.s32.totalorder %s17, 1
    %p145 = por %p143, %p144
    %p147 = scmp.ne.s32.totalorder %s132, %s146
    %p148 = scmp.eq.s32.totalorder %s17, 0
    %p149 = por %p147, %p148
    %s150 = ssub.s32 %s18, %s30
    %s151 = ssub.s32 %s19, %s26
    %s152 = sor.u32 %s150, %s151
    %p153 = scmp.eq.s32.totalorder %s152, 0
    %s155 = sadd.s32 %s154, 1
    %s156 = scalar_select %p153, %s154, %s155
    %p159 = pneg %p153
    %p160 = scmp.eq.s32.totalorder %s11, 1
    %p161 = por %p159, %p160
    %p162 = scmp.ne.s32.totalorder %s154, %s157
    %p163 = scmp.eq.s32.totalorder %s11, 0
    %p164 = por %p162, %p163
    %p165 = scmp.ne.s32.totalorder %s154, %s157
    %p166 = scmp.eq.s32.totalorder %s16, 1
    %p167 = por %p165, %p166
    %p168 = scmp.ne.s32.totalorder %s157, %s158
    %p169 = scmp.eq.s32.totalorder %s16, 0
    %p170 = por %p168, %p169
    %p171 = scmp.ne.s32.totalorder %s157, %s158
    %p172 = scmp.eq.s32.totalorder %s17, 1
    %p173 = por %p171, %p172
    %p175 = scmp.ne.s32.totalorder %s158, %s174
    %p176 = scmp.eq.s32.totalorder %s17, 0
    %p177 = por %p175, %p176
    %p178 = scmp.le.s32.totalorder 1, %s11
    %p179 = scmp.lt.s32.totalorder %s11, 3
    %p180 = pnand %p178, %p179
    %p181 = pneg %p180
    // Predicated region
    $region9: #{spectral_transform.9} parent=5 // pred_check
      _
    $region10: #{spectral_transform.9} parent=5 // pred_check_branch
      %183 = sbr.rel (%p180) target = $region12
    $region11: #{spectral_transform.9} parent=5 // pred_region
      %s184 = ssub.s32 %s11, 1
      // Predicated region
      $region13: #{spectral_transform.9} parent=11 // pred_check
        %p185 = pneg %p100
      $region14: #{spectral_transform.9} parent=11 // pred_check_branch
        %187 = sbr.rel (%p185) target = $region16
      $region15: #{spectral_transform.9} parent=11 // pred_region
        _
      $region16: #{spectral_transform.9} parent=11 // pred_fallthru
        _
      // Predicated region
      $region17: #{spectral_transform.9} parent=11 // pred_check
        %p188 = pneg %p121
      $region18: #{spectral_transform.9} parent=11 // pred_check_branch
        %190 = sbr.rel (%p188) target = $region20
      $region19: #{spectral_transform.9} parent=11 // pred_region
        _
      $region20: #{spectral_transform.9} parent=11 // pred_fallthru
        _
      // Predicated region
      $region21: #{spectral_transform.9} parent=11 // pred_check
        %p191 = pneg %p142
      $region22: #{spectral_transform.9} parent=11 // pred_check_branch
        %193 = sbr.rel (%p191) target = $region24
      $region23: #{spectral_transform.9} parent=11 // pred_region
        _
      $region24: #{spectral_transform.9} parent=11 // pred_fallthru
        _
    $region12: #{spectral_transform.9} parent=5 // pred_fallthru
      _
    %p194 = scmp.lt.s32.totalorder %s11, 2
    // Predicated region
    $region25: #{spectral_transform.9} parent=5 // pred_check
      %p195 = pneg %p194
    $region26: #{spectral_transform.9} parent=5 // pred_check_branch
      %197 = sbr.rel (%p195) target = $region28
    $region27: #{spectral_transform.9} parent=5 // pred_region
      // Predicated region
      $region29: #{spectral_transform.9} parent=27 // pred_check
        %p198 = pneg %p45
      $region30: #{spectral_transform.9} parent=27 // pred_check_branch
        %200 = sbr.rel (%p198) target = $region32
      $region31: #{spectral_transform.9} parent=27 // pred_region
        %s201 = smul.u32 2, %s19
        %p202 = scmp.lt.s32.totalorder %s18, 1
        %s203 = scalar_select %p202, %s18, 1
        %p204 = scmp.lt.s32.totalorder %s201, 1
        %s205 = scalar_select %p204, %s201, 1
        %s206 = smul.addr %s203, 2
        %s207 = sadd.s32 %s205, %s206
        %s208 = smul.addr %s207, 2
        %s209 = scalar_lea.vmem %s0, %s208
        %s210 = smul.u32 2, %s19
      $region32: #{spectral_transform.9} parent=27 // pred_fallthru
        _
      // Predicated region
      $region33: #{spectral_transform.9} parent=27 // pred_check
        %p211 = pneg %p73
      $region34: #{spectral_transform.9} parent=27 // pred_check_branch
        %213 = sbr.rel (%p211) target = $region36
      $region35: #{spectral_transform.9} parent=27 // pred_region
        %s214 = smul.u32 2, %s19
        %p215 = scmp.lt.s32.totalorder %s18, 1
        %s216 = scalar_select %p215, %s18, 1
        %p217 = scmp.lt.s32.totalorder %s214, 1
        %s218 = scalar_select %p217, %s214, 1
        %s219 = smul.addr %s216, 2
        %s220 = sadd.s32 %s218, %s219
        %s221 = smul.addr %s220, 4
        %s222 = scalar_lea.vmem %s1, %s221
        %s223 = smul.u32 2, %s19
      $region36: #{spectral_transform.9} parent=27 // pred_fallthru
        _
    $region28: #{spectral_transform.9} parent=5 // pred_fallthru
      _
    %p224 = scmp.le.s32.totalorder 1, %s11
    %p225 = scmp.lt.s32.totalorder %s11, 3
    %p226 = pnand %p224, %p225
    %p227 = pneg %p226
    // Predicated region
    $region37: #{spectral_transform.9} parent=5 // pred_check
      _
    $region38: #{spectral_transform.9} parent=5 // pred_check_branch
      %229 = sbr.rel (%p226) target = $region40
    $region39: #{spectral_transform.9} parent=5 // pred_region
      %s230 = ssub.s32 %s11, 1
      %s231 = smul.u32 2, %s21
      %p232 = scmp.lt.s32.totalorder %s20, 1
      %s233 = scalar_select %p232, %s20, 1
      %p234 = scmp.lt.s32.totalorder %s231, 1
      %s235 = scalar_select %p234, %s231, 1
      %s236 = smul.addr %s233, 2
      %s237 = sadd.s32 %s235, %s236
      %s238 = smul.addr %s237, 2
      %s239 = scalar_lea.vmem %s0, %s238
      %p240 = pneg %p51
      %p241 = pneg %p48
      %s242 = smul.u32 2, %s21
      %p243 = scmp.lt.s32.totalorder %s20, 1
      %s244 = scalar_select %p243, %s20, 1
      %p245 = scmp.lt.s32.totalorder %s242, 1
      %s246 = scalar_select %p245, %s242, 1
      %s247 = smul.addr %s244, 2
      %s248 = sadd.s32 %s246, %s247
      %s249 = smul.addr %s248, 4
      %s250 = scalar_lea.vmem %s1, %s249
      %p251 = pneg %p79
      %p252 = pneg %p76
      %p253 = pneg %p100
      %p254 = pneg %p97
      %p255 = pneg %p121
      %p256 = pneg %p118
      %p257 = pneg %p142
      %p258 = pneg %p139
      %p259 = pneg %p170
      %p260 = pneg %p167
      %s261 = smul.u32 2, %s21
      %p262 = scmp.lt.s32.totalorder %s20, 1
      %s263 = scalar_select %p262, %s20, 1
      %p264 = scmp.lt.s32.totalorder %s261, 1
      %s265 = scalar_select %p264, %s261, 1
      %s266 = smul.addr %s263, 2
      %s267 = sadd.s32 %s265, %s266
      %s268 = smul.addr %s267, 8
      %s269 = scalar_lea.vmem %s5, %s268
      %s270 = smul.u32 2, %s21
      %p271 = scmp.lt.s32.totalorder %s20, 1
      %s272 = scalar_select %p271, %s20, 1
      %p273 = scmp.lt.s32.totalorder %s270, 1
      %s274 = scalar_select %p273, %s270, 1
      %s275 = smul.addr %s272, 2
      %s276 = sadd.s32 %s274, %s275
      %s277 = smul.addr %s276, 2
      %s278 = scalar_lea.vmem %s0, %s277
      %s279 = smul.u32 2, %s21
      %s280 = smul.u32 2, %s21
      %p281 = scmp.lt.s32.totalorder %s20, 1
      %s282 = scalar_select %p281, %s20, 1
      %p283 = scmp.lt.s32.totalorder %s280, 1
      %s284 = scalar_select %p283, %s280, 1
      %s285 = smul.addr %s282, 2
      %s286 = sadd.s32 %s284, %s285
      %s287 = smul.addr %s286, 4
      %s288 = scalar_lea.vmem %s1, %s287
      %s289 = smul.u32 2, %s21
      %s290 = smul.u32 2, %s21
      %p291 = scmp.lt.s32.totalorder %s20, 1
      %s292 = scalar_select %p291, %s20, 1
      %p293 = scmp.lt.s32.totalorder %s290, 1
      %s294 = scalar_select %p293, %s290, 1
      %s295 = smul.addr %s292, 2
      %s296 = sadd.s32 %s294, %s295
      %s297 = smul.addr %s296, 8
      %s298 = scalar_lea.vmem %s5, %s297
      %s299 = smul.u32 2, %s21
      %v301 = vld [vmem:[%s278] sm:$0xf]
      %v302 = vunpack.c.l.bf16 %v301
      %v303 = vld [vmem:[%s2] sm:$0xf]
      %305 = vset.pattern.permute.xlu0 0
      %306 = vperm.xlu0 %305, %v303
      %v307 = vpop.permute.xlu0 %306
      %v309 = vunpack.c.l.s4 839922192
      %v310 = vunpack.c.0.s8 %v309
      %v311 = vlaneseq
      %v312 = vshrl.u32 %v311, 7
      %v313 = vsub.s32 %v310, %v312
      %v314 = vrot.slane %v307, %v313
      %v316 = vmul.f32 %v302, %v314
      %v317 = vld [vmem:[%s3] sm:$0xf]
      %319 = vset.pattern.permute.xlu0 0
      %320 = vperm.xlu0 %319, %v317
      %v321 = vpop.permute.xlu0 %320
      %v323 = vunpack.c.l.s4 839922192
      %v324 = vunpack.c.0.s8 %v323
      %v325 = vlaneseq
      %v326 = vshrl.u32 %v325, 7
      %v327 = vsub.s32 %v324, %v326
      %v328 = vrot.slane %v321, %v327
      %v330 = vadd.f32 %v316, %v328
      %v331 = vmax.f32 %v330, 0.0
      %v332 = vld [vmem:[%s288] sm:$0xff]
      %v333 = vadd.f32 %v331, %v332
      %v335 = vcombine.high %v333, %v333
      %v337 = vpack.c.bf16 %v333, %v333
      %v338 = vpack.c.bf16 %v335, %v335
      %v339 = vld [vmem:[%s4] sm:$0xf]
      %vm340 = vcmask 31744
      %v342 = vsel %vm340, %v339, 0
      %vm344 = vcmask 1041408
      %v346 = vsel %vm344, %v337, 0
      %v349 = vsel %vm344, %v338, 0
      %351 = vmatprep.subr.bf16.mxu0 %v349
      %352 = vmatpush1.bf16.msra.mxu0 %v346
      %353 = vmatprep.subr.bf16.mxu0 0
      %354 = vmatpush1.bf16.msra.mxu0 0
      %355 = vmatprep.subr.bf16.mxu0 0
      %356 = vmatpush1.bf16.msra.mxu0 0
      %357 = vmatprep.subr.bf16.mxu0 0
      %358 = vmatpush1.bf16.msra.mxu0 0
      %359 = vmatprep.subr.bf16.mxu0 0
      %360 = vmatpush1.bf16.msra.mxu0 0
      %361 = vmatprep.subr.bf16.mxu0 0
      %362 = vmatpush1.bf16.msra.mxu0 0
      %363 = vmatprep.subr.bf16.mxu0 0
      %364 = vmatpush1.bf16.msra.mxu0 0
      %365 = vmatprep.subr.bf16.mxu0 0
      %366 = vmatpush1.bf16.msra.mxu0 0
      %367 = vmatprep.subr.bf16.mxu0 0
      %368 = vmatpush1.bf16.msra.mxu0 0
      %369 = vmatprep.subr.bf16.mxu0 0
      %370 = vmatpush1.bf16.msra.mxu0 0
      %371 = vmatprep.subr.bf16.mxu0 0
      %372 = vmatpush1.bf16.msra.mxu0 0
      %373 = vmatprep.subr.bf16.mxu0 0
      %374 = vmatpush1.bf16.msra.mxu0 0
      %375 = vmatprep.subr.bf16.mxu0 0
      %376 = vmatpush1.bf16.msra.mxu0 0
      %377 = vmatprep.subr.bf16.mxu0 0
      %378 = vmatpush1.bf16.msra.mxu0 0
      %379 = vmatprep.subr.bf16.mxu0 0
      %380 = vmatpush1.bf16.msra.mxu0 0
      %381 = vmatprep.subr.bf16.mxu0 0
      %382 = vmatpush1.bf16.msra.mxu0 0
      %383 = vmatprep.mubr.bf16.mxu0 0
      %384 = vmatmul.mubr.bf16.gmra.mrb[0].mxu0 %v342
      %v385 = vpop.f32.mrb[0].mxu0
      %v386 = vadd.f32 0.0, %v385
      %v387 = vpop.f32.mrb[0].mxu0
      %v388 = vadd.f32 0.0, %v387
      %v389 = vpop.f32.mrb[0].mxu0
      %v390 = vpop.f32.mrb[0].mxu0
      %391 = vdwg.mxu0
      %392 = vst [vmem:[%s298] sm:$0xff] %v386
      %393 = vst [vmem:[%s298 + $0x8] sm:$0xff] %v388
      %s394 = smul.u32 2, %s21
      %p395 = scmp.lt.s32.totalorder %s20, 1
      %s396 = scalar_select %p395, %s20, 1
      %p397 = scmp.lt.s32.totalorder %s394, 1
      %s398 = scalar_select %p397, %s394, 1
      %s399 = smul.addr %s396, 2
      %s400 = sadd.s32 %s398, %s399
      %s401 = smul.addr %s400, 8
      %s402 = scalar_lea.vmem %s5, %s401
      // Predicated region
      $region41: #{spectral_transform.9} parent=39 // pred_check
        %p403 = pneg %p167
      $region42: #{spectral_transform.9} parent=39 // pred_check_branch
        %405 = sbr.rel (%p403) target = $region44
      $region43: #{spectral_transform.9} parent=39 // pred_region
        %s406 = smul.u32 2, %s21
      $region44: #{spectral_transform.9} parent=39 // pred_fallthru
        _
    $region40: #{spectral_transform.9} parent=5 // pred_fallthru
      _
    %p407 = scmp.le.s32.totalorder 2, %s11
    // Predicated region
    $region45: #{spectral_transform.9} parent=5 // pred_check
      %p408 = pneg %p407
    $region46: #{spectral_transform.9} parent=5 // pred_check_branch
      %410 = sbr.rel (%p408) target = $region48
    $region47: #{spectral_transform.9} parent=5 // pred_region
      %s411 = ssub.s32 %s11, 2
      // Predicated region
      $region49: #{spectral_transform.9} parent=47 // pred_check
        %p412 = pneg %p173
      $region50: #{spectral_transform.9} parent=47 // pred_check_branch
        %414 = sbr.rel (%p412) target = $region52
      $region51: #{spectral_transform.9} parent=47 // pred_region
        %s415 = smul.u32 2, %s23
        %p416 = scmp.lt.s32.totalorder %s22, 1
        %s417 = scalar_select %p416, %s22, 1
        %p418 = scmp.lt.s32.totalorder %s415, 1
        %s419 = scalar_select %p418, %s415, 1
        %s420 = smul.addr %s417, 2
        %s421 = sadd.s32 %s419, %s420
        %s422 = smul.addr %s421, 8
        %s423 = scalar_lea.vmem %s5, %s422
      $region52: #{spectral_transform.9} parent=47 // pred_fallthru
        _
    $region48: #{spectral_transform.9} parent=5 // pred_fallthru
      _
  $region6: #{spectral_transform.9} parent=0 // loop_footer
    %s15 = sadd.s32 1, %s11
  $region7: #{spectral_transform.9} parent=0 // loop_footer_branch
    %10 = sbr.rel target = $region3
  $region8: #{spectral_transform.9} parent=0 // loop_exit
    _

</llo_original>
